<compile_context>
chip_gen: v7x
topology: tpu7x:2x2x1
jax: 0.10.0
libtpu: 0.0.40
codegen_flags: <defaults>
</compile_context>

<pallas_src>
import jax
import jax.numpy as jnp
from jax import lax
from jax.experimental import pallas as pl
from jax.experimental.pallas import tpu as pltpu


def metanet_kernel(x_ref, w1_ref, b1_ref, w2_ref, o_ref, h_ref, mean_ref, inv_ref):
    # grid = (c, k): c = H1-half (parallel, megacore), k = D reduction tile.
    k = pl.program_id(1)
    nk = pl.num_programs(1)

    @pl.when(k == 0)
    def _init():
        # Per-row standardization stats, computed once per c-half.
        x = x_ref[...]                                            # [B, D] f32
        d = x.shape[1]
        mean = jnp.mean(x, axis=1, keepdims=True)                 # [B, 1]
        xc = x - mean
        var = jnp.sum(xc * xc, axis=1, keepdims=True) / jnp.float32(d - 1)
        mean_ref[...] = mean
        # Single fused per-row scale: 0.02 / std (rsqrt -> EUP slot).
        inv_ref[...] = lax.rsqrt(var) * jnp.float32(0.02)
        h_ref[...] = jnp.zeros(h_ref.shape, h_ref.dtype)

    # --- first matmul, streamed over D tiles of w1 ---
    tk = w1_ref.shape[0]
    start = pl.multiple_of(k * tk, tk)
    x_chunk = x_ref[:, pl.ds(start, tk)]                          # [B, tk] f32
    x_norm = (x_chunk - mean_ref[...]) * inv_ref[...]             # [B, tk]
    w1 = w1_ref[...].astype(jnp.float32)                          # bf16 -> f32 (free: HBM-bound)
    h_ref[...] += jnp.dot(x_norm, w1, preferred_element_type=jnp.float32)

    # --- epilogue: bias + ReLU + second matmul (partial over this H1-half) ---
    @pl.when(k == nk - 1)
    def _finish():
        h = jnp.maximum(h_ref[...] + b1_ref[...], jnp.float32(0.0))   # [B, H1h]
        w2 = w2_ref[...].astype(jnp.float32)                          # [H1h, H2]
        o_ref[0] = jnp.dot(h, w2, preferred_element_type=jnp.float32).astype(o_ref.dtype)


def metanet_forward(features, w1, b1, w2, b2, *, tk=1024, num_core_splits=2):
    """features: [B, 2048] f32; w1: [2048, 1024]; b1: [1024]; w2: [1024, H]; b2: [H]."""
    B, D = features.shape
    H1 = w1.shape[1]
    H2 = w2.shape[1]
    nc = num_core_splits
    assert D % tk == 0 and H1 % nc == 0 and B % 8 == 0
    H1h = H1 // nc
    nk = D // tk

    # bf16 weights: halves the dominant HBM traffic of this bandwidth-bound kernel.
    w1_bf16 = w1.astype(jnp.bfloat16)
    w2_bf16 = w2.astype(jnp.bfloat16)
    b1_2d = b1.reshape(1, H1).astype(jnp.float32)

    partials = pl.pallas_call(
        metanet_kernel,
        out_shape=jax.ShapeDtypeStruct((nc, B, H2), jnp.float32),
        grid_spec=pltpu.PrefetchScalarGridSpec(
            num_scalar_prefetch=0,
            grid=(nc, nk),
            in_specs=[
                # x: resident full block (64 KiB), same block every step -> DMA'd once.
                pl.BlockSpec((B, D), lambda c, k: (0, 0)),
                # w1: streamed (tk, H1/2) bf16 tiles; k varies fastest -> pipelined stream.
                pl.BlockSpec((tk, H1h), lambda c, k: (k, c)),
                # b1: the c-half of the first bias.
                pl.BlockSpec((1, H1h), lambda c, k: (0, c)),
                # w2: the c-half of the second weight (rows matching this H1 half).
                pl.BlockSpec((H1h, H2), lambda c, k: (c, 0)),
            ],
            # Lane-dense (H2 >= 128) partial output per c-half; constant over k
            # (accumulator semantics along the reduction axis).
            out_specs=pl.BlockSpec((1, B, H2), lambda c, k: (c, 0, 0)),
            scratch_shapes=[
                pltpu.VMEM((B, H1h), jnp.float32),   # h accumulator (first matmul)
                pltpu.VMEM((B, 1), jnp.float32),     # per-row mean
                pltpu.VMEM((B, 1), jnp.float32),     # per-row 0.02/std
            ],
        ),
        compiler_params=pltpu.CompilerParams(
            # c axis is independent -> megacore-shardable on v7x; k is a reduction.
            dimension_semantics=("parallel", "arbitrary"),
            # Actual need ~5 MiB after K-tiling + bf16; keep headroom without
            # requesting the whole VMEM (v7x only has 64 MiB per TC).
            vmem_limit_bytes=16 << 20,
        ),
    )(features, w1_bf16, b1_2d, w2_bf16)

    # Combine the two H1-half partials and add the final bias (trivial XLA ops).
    return partials.sum(axis=0) + b2.reshape(1, H2)


def reference_forward(features, w1, b1, w2, b2):
    x = features.astype(jnp.float32)
    mean = jnp.mean(x, axis=1, keepdims=True)
    std = jnp.std(x, axis=1, keepdims=True, ddof=1)
    x = (x - mean) / std * 0.02
    h = jnp.maximum(
        jnp.dot(x, w1, precision=lax.Precision.HIGHEST) + b1, 0.0)
    return jnp.dot(h, w2, precision=lax.Precision.HIGHEST) + b2


if __name__ == "__main__":
    B = 8              # batch (one sublane)
    D_FEAT = 2048      # InceptionV3 feature dim
    H1 = 1024          # meta_linear_1 out
    V_H_DIM = 256      # cfg.model.v_h_dim

    key = jax.random.PRNGKey(0)
    k_feat, k_w1, k_b1, k_w2, k_b2 = jax.random.split(key, 5)

    # Stand-in for the (untranslatable) pretrained-backbone output features.
    features = jax.random.normal(k_feat, (B, D_FEAT), dtype=jnp.float32)

    # Deterministic parameter init (PyTorch nn.Linear-style uniform bounds).
    lim1 = 1.0 / (D_FEAT ** 0.5)
    lim2 = 1.0 / (H1 ** 0.5)
    w1 = jax.random.uniform(k_w1, (D_FEAT, H1), jnp.float32, -lim1, lim1)
    b1 = jax.random.uniform(k_b1, (H1,), jnp.float32, -lim1, lim1)
    w2 = jax.random.uniform(k_w2, (H1, V_H_DIM), jnp.float32, -lim2, lim2)
    b2 = jax.random.uniform(k_b2, (V_H_DIM,), jnp.float32, -lim2, lim2)

    out = metanet_forward(features, w1, b1, w2, b2)
    out = jax.block_until_ready(out)
    assert out.shape == (B, V_H_DIM), out.shape

    # Tight check: kernel vs f32 reference using the same bf16-quantized weights
    # (validates the kernel math exactly).
    w1_q = w1.astype(jnp.bfloat16).astype(jnp.float32)
    w2_q = w2.astype(jnp.bfloat16).astype(jnp.float32)
    ref_q = reference_forward(features, w1_q, b1, w2_q, b2)
    assert jnp.allclose(out, ref_q, atol=1e-4, rtol=1e-3), float(
        jnp.max(jnp.abs(out - ref_q)))

    # Looser check vs the full-f32 module semantics (documents the intentional
    # bf16 weight-storage quantization used to halve HBM traffic).
    ref_f32 = reference_forward(features, w1, b1, w2, b2)
    assert jnp.allclose(out, ref_f32, atol=5e-3, rtol=5e-3), float(
        jnp.max(jnp.abs(out - ref_f32)))

    print("KERNEL_OK")
</pallas_src>

<mosaic_0001>
module attributes {stable_mosaic.version = 11 : i64} {
  func.func @metanet_kernel(%arg0: i32, %arg1: i32, %arg2: memref<8x2048xf32, #tpu.memory_space<vmem>>, %arg3: memref<1024x512xbf16, #tpu.memory_space<vmem>>, %arg4: memref<1x512xf32, #tpu.memory_space<vmem>>, %arg5: memref<512x256xbf16, #tpu.memory_space<vmem>>, %arg6: memref<1x8x256xf32, #tpu.memory_space<vmem>>, %arg7: memref<8x512xf32, #tpu.memory_space<vmem>>, %arg8: memref<8x1xf32, #tpu.memory_space<vmem>>, %arg9: memref<8x1xf32, #tpu.memory_space<vmem>>) attributes {dimension_semantics = [#tpu.dimension_semantics<parallel>, #tpu.dimension_semantics<arbitrary>], iteration_bounds = array<i64: 2, 2>, scalar_prefetch = 0 : i64, scratch_operands = 3 : i64, tpu.core_type = #tpu.core_type<tc>, window_params = [{pipeline_mode = #tpu.pipeline_mode<synchronous>, transform_indices = @transform_0, window_bounds = array<i64: 8, 2048>}, {transform_indices = @transform_1, window_bounds = array<i64: 1024, 512>}, {transform_indices = @transform_2, window_bounds = array<i64: 1, 512>}, {transform_indices = @transform_3, window_bounds = array<i64: 512, 256>}, {transform_indices = @transform_4, window_bounds = array<i64: 1, 8, 256>}]} {
    %c0_i32 = arith.constant 0 : i32
    %0 = arith.cmpi eq, %arg1, %c0_i32 : i32
    %1 = arith.extui %0 : i1 to i32
    %c0_i32_0 = arith.constant 0 : i32
    %2 = arith.cmpi ne, %1, %c0_i32_0 : i32
    scf.if %2 {
      %c0_12 = arith.constant 0 : index
      %c0_13 = arith.constant 0 : index
      %22 = vector.load %arg2[%c0_12, %c0_13] : memref<8x2048xf32, #tpu.memory_space<vmem>>, vector<8x2048xf32>
      %cst_14 = arith.constant dense<0.000000e+00> : vector<8xf32>
      %23 = vector.multi_reduction <add>, %22, %cst_14 [1] : vector<8x2048xf32> to vector<8xf32>
      %24 = vector.shape_cast %23 : vector<8xf32> to vector<8x1xf32>
      %cst_15 = arith.constant 2.048000e+03 : f32
      %25 = vector.broadcast %cst_15 : f32 to vector<8x1xf32>
      %26 = arith.divf %24, %25 : vector<8x1xf32>
      %27 = vector.broadcast %26 : vector<8x1xf32> to vector<8x2048xf32>
      %28 = arith.subf %22, %27 : vector<8x2048xf32>
      %29 = arith.mulf %28, %28 : vector<8x2048xf32>
      %cst_16 = arith.constant dense<0.000000e+00> : vector<8xf32>
      %30 = vector.multi_reduction <add>, %29, %cst_16 [1] : vector<8x2048xf32> to vector<8xf32>
      %31 = vector.shape_cast %30 : vector<8xf32> to vector<8x1xf32>
      %cst_17 = arith.constant 2.047000e+03 : f32
      %32 = vector.broadcast %cst_17 : f32 to vector<8x1xf32>
      %33 = arith.divf %31, %32 : vector<8x1xf32>
      %c0_18 = arith.constant 0 : index
      %c0_19 = arith.constant 0 : index
      %34 = vector.load %arg8[%c0_18, %c0_19] : memref<8x1xf32, #tpu.memory_space<vmem>>, vector<8x1xf32>
      tpu.vector_store %arg8[%c0_18, %c0_19], %26 {strides = array<i32>} : memref<8x1xf32, #tpu.memory_space<vmem>>, vector<8x1xf32>,
      %35 = math.rsqrt %33 : vector<8x1xf32>
      %cst_20 = arith.constant 2.000000e-02 : f32
      %36 = vector.broadcast %cst_20 : f32 to vector<8x1xf32>
      %37 = arith.mulf %35, %36 : vector<8x1xf32>
      %c0_21 = arith.constant 0 : index
      %c0_22 = arith.constant 0 : index
      %38 = vector.load %arg9[%c0_21, %c0_22] : memref<8x1xf32, #tpu.memory_space<vmem>>, vector<8x1xf32>
      tpu.vector_store %arg9[%c0_21, %c0_22], %37 {strides = array<i32>} : memref<8x1xf32, #tpu.memory_space<vmem>>, vector<8x1xf32>,
      %cst_23 = arith.constant 0.000000e+00 : f32
      %39 = vector.broadcast %cst_23 : f32 to vector<8x512xf32>
      %c0_24 = arith.constant 0 : index
      %c0_25 = arith.constant 0 : index
      %40 = vector.load %arg7[%c0_24, %c0_25] : memref<8x512xf32, #tpu.memory_space<vmem>>, vector<8x512xf32>
      tpu.vector_store %arg7[%c0_24, %c0_25], %39 {strides = array<i32>} : memref<8x512xf32, #tpu.memory_space<vmem>>, vector<8x512xf32>,
    } else {
    }
    %c1024_i32 = arith.constant 1024 : i32
    %3 = arith.muli %arg1, %c1024_i32 : i32
    %4 = tpu.assume_multiple %3, 1024 : i32
    %c0 = arith.constant 0 : index
    %5 = arith.index_cast %4 : i32 to index
    %6 = vector.load %arg2[%c0, %5] : memref<8x2048xf32, #tpu.memory_space<vmem>>, vector<8x1024xf32>
    %c0_1 = arith.constant 0 : index
    %c0_2 = arith.constant 0 : index
    %7 = vector.load %arg8[%c0_1, %c0_2] : memref<8x1xf32, #tpu.memory_space<vmem>>, vector<8x1xf32>
    %8 = vector.broadcast %7 : vector<8x1xf32> to vector<8x1024xf32>
    %9 = arith.subf %6, %8 : vector<8x1024xf32>
    %c0_3 = arith.constant 0 : index
    %c0_4 = arith.constant 0 : index
    %10 = vector.load %arg9[%c0_3, %c0_4] : memref<8x1xf32, #tpu.memory_space<vmem>>, vector<8x1xf32>
    %11 = vector.broadcast %10 : vector<8x1xf32> to vector<8x1024xf32>
    %12 = arith.mulf %9, %11 : vector<8x1024xf32>
    %c0_5 = arith.constant 0 : index
    %c0_6 = arith.constant 0 : index
    %13 = vector.load %arg3[%c0_5, %c0_6] : memref<1024x512xbf16, #tpu.memory_space<vmem>>, vector<1024x512xbf16>
    %14 = arith.extf %13 : vector<1024x512xbf16> to vector<1024x512xf32>
    %c0_7 = arith.constant 0 : index
    %c0_8 = arith.constant 0 : index
    %15 = vector.load %arg7[%c0_7, %c0_8] : memref<8x512xf32, #tpu.memory_space<vmem>>, vector<8x512xf32>
    %cst = arith.constant dense<0.000000e+00> : vector<8x512xf32>
    %16 = tpu.matmul %12, %14, %cst {dimension_numbers = #tpu.dot_dimension_numbers<[1], [0], [0], [1], [0, 0, 1, 1], [], []>} : vector<8x1024xf32>, vector<1024x512xf32>, vector<8x512xf32> -> vector<8x512xf32>
    %17 = arith.addf %15, %16 : vector<8x512xf32>
    %c0_9 = arith.constant 0 : index
    %c0_10 = arith.constant 0 : index
    %18 = vector.load %arg7[%c0_9, %c0_10] : memref<8x512xf32, #tpu.memory_space<vmem>>, vector<8x512xf32>
    tpu.vector_store %arg7[%c0_9, %c0_10], %17 {strides = array<i32>} : memref<8x512xf32, #tpu.memory_space<vmem>>, vector<8x512xf32>,
    %c1_i32 = arith.constant 1 : i32
    %19 = arith.cmpi eq, %arg1, %c1_i32 : i32
    %20 = arith.extui %19 : i1 to i32
    %c0_i32_11 = arith.constant 0 : i32
    %21 = arith.cmpi ne, %20, %c0_i32_11 : i32
    scf.if %21 {
      %c0_12 = arith.constant 0 : index
      %c0_13 = arith.constant 0 : index
      %22 = vector.load %arg7[%c0_12, %c0_13] : memref<8x512xf32, #tpu.memory_space<vmem>>, vector<8x512xf32>
      %c0_14 = arith.constant 0 : index
      %c0_15 = arith.constant 0 : index
      %23 = vector.load %arg4[%c0_14, %c0_15] : memref<1x512xf32, #tpu.memory_space<vmem>>, vector<1x512xf32>
      %24 = vector.broadcast %23 : vector<1x512xf32> to vector<8x512xf32>
      %25 = arith.addf %22, %24 : vector<8x512xf32>
      %cst_16 = arith.constant 0.000000e+00 : f32
      %26 = vector.broadcast %cst_16 : f32 to vector<8x512xf32>
      %27 = arith.maximumf %25, %26 : vector<8x512xf32>
      %c0_17 = arith.constant 0 : index
      %c0_18 = arith.constant 0 : index
      %28 = vector.load %arg5[%c0_17, %c0_18] : memref<512x256xbf16, #tpu.memory_space<vmem>>, vector<512x256xbf16>
      %29 = arith.extf %28 : vector<512x256xbf16> to vector<512x256xf32>
      %cst_19 = arith.constant dense<0.000000e+00> : vector<8x256xf32>
      %30 = tpu.matmul %27, %29, %cst_19 {dimension_numbers = #tpu.dot_dimension_numbers<[1], [0], [0], [1], [0, 0, 1, 1], [], []>} : vector<8x512xf32>, vector<512x256xf32>, vector<8x256xf32> -> vector<8x256xf32>
      %c0_20 = arith.constant 0 : index
      %c0_21 = arith.constant 0 : index
      %c0_22 = arith.constant 0 : index
      %31 = vector.load %arg6[%c0_20, %c0_21, %c0_22] : memref<1x8x256xf32, #tpu.memory_space<vmem>>, vector<1x8x256xf32>
      %32 = vector.shape_cast %31 : vector<1x8x256xf32> to vector<8x256xf32>
      %33 = vector.shape_cast %30 : vector<8x256xf32> to vector<1x8x256xf32>
      tpu.vector_store %arg6[%c0_20, %c0_21, %c0_22], %33 {strides = array<i32>} : memref<1x8x256xf32, #tpu.memory_space<vmem>>, vector<1x8x256xf32>,
    } else {
    }
    return
  }
  func.func @transform_0(%arg0: i32, %arg1: i32) -> (i32, i32) {
    %c0_i32 = arith.constant 0 : i32
    %c0_i32_0 = arith.constant 0 : i32
    %c0_i32_1 = arith.constant 0 : i32
    return %c0_i32, %c0_i32_0 : i32, i32
  }
  func.func @transform_1(%arg0: i32, %arg1: i32) -> (i32, i32) {
    %c0_i32 = arith.constant 0 : i32
    return %arg1, %arg0 : i32, i32
  }
  func.func @transform_2(%arg0: i32, %arg1: i32) -> (i32, i32) {
    %c0_i32 = arith.constant 0 : i32
    %c0_i32_0 = arith.constant 0 : i32
    return %c0_i32, %arg0 : i32, i32
  }
  func.func @transform_3(%arg0: i32, %arg1: i32) -> (i32, i32) {
    %c0_i32 = arith.constant 0 : i32
    %c0_i32_0 = arith.constant 0 : i32
    return %arg0, %c0_i32 : i32, i32
  }
  func.func @transform_4(%arg0: i32, %arg1: i32) -> (i32, i32, i32) {
    %c0_i32 = arith.constant 0 : i32
    %c0_i32_0 = arith.constant 0 : i32
    %c0_i32_1 = arith.constant 0 : i32
    return %arg0, %c0_i32, %c0_i32_0 : i32, i32, i32
  }
}

</mosaic_0001>

<llo_original>
// kernel: tpu_custom_call.1
$region0: #{tpu_custom_call.1}
  #allocation0 [shape = 'u32[]', space=smem, size = 0x4, offset = 0x4, fixed_abs, tag = 'smem constant byte address 0x4 - core index']
  #allocation1 [shape = 'u32[144,128]{1,0:T(1,128)}', space=vmem, size = 0x12000, scoped, tag = 'internal scratch']
  #allocation2 [shape = 'f32[8,512]{1,0:T(8,128)}', space=vmem, size = 0x4000, scoped, tag = 'scratch operand']
  #allocation3 [shape = 'f32[8,1]{1,0:T(8,128)}', space=vmem, size = 0x1000, scoped, tag = 'scratch operand']
  #allocation4 [shape = 'f32[8,1]{1,0:T(8,128)}', space=vmem, size = 0x1000, scoped, tag = 'scratch operand']
  %s0 = inlined_call_operand.hbm [shape: f32[8,2048], index: 0, kind: input, shape index: {}]
  %s1 = inlined_call_operand.hbm [shape: bf16[2048,1024], index: 1, kind: input, shape index: {}]
  %s2 = inlined_call_operand.hbm [shape: f32[1,1024], index: 2, kind: input, shape index: {}]
  %s3 = inlined_call_operand.hbm [shape: bf16[1024,256], index: 3, kind: input, shape index: {}]
  %s4 = inlined_call_operand.hbm [shape: f32[2,8,256], index: 4, kind: output, shape index: {}]
  %s5 = sld [smem:[#allocation0]]
  $region73: #{tpu_custom_call.1} parent=0
    _
  %s7 = ssub.s32 1, %s5
  %s8 = scalar_select 0, %s7, %s5
  $region1: #{tpu_custom_call.1} parent=0
    #allocation5 [shape = 'u8[65536]{0}', space=vmem, size = 0x10000, scoped, tag = 'input window, operand 0, single buffered']
    #allocation6 [shape = 's32[2]{0}', space=sflag, size = 0x8, scoped, tag = 'scoped memory for tpu_custom_call.1']
    #allocation7 [shape = 's32[2]{0}', space=sflag, size = 0x8, scoped, tag = 'scoped memory for tpu_custom_call.1']
    #allocation8 [shape = 'u8[2097152]{0}', space=vmem, size = 0x200000, scoped, tag = 'input window, operand 1']
    #allocation9 [shape = 's32[2]{0}', space=sflag, size = 0x8, scoped, tag = 'scoped memory for tpu_custom_call.1']
    #allocation10 [shape = 'u8[4096]{0}', space=vmem, size = 0x1000, scoped, tag = 'input window, operand 2']
    #allocation11 [shape = 'u8[524288]{0}', space=vmem, size = 0x80000, scoped, tag = 'input window, operand 3']
    #allocation12 [shape = 's32[2]{0}', space=sflag, size = 0x8, scoped, tag = 'scoped memory for tpu_custom_call.1']
    #allocation13 [shape = 'u8[16384]{0}', space=vmem, size = 0x4000, scoped, tag = 'output window, operand 0']
    %9 = vsyncpa [#allocation6], 0
    %10 = vsyncpa [#allocation9], 0
    %s11 = scalar_lea.sflag [#allocation9], 1
    %12 = vsyncpa %s11, 0
    %13 = vsyncpa [#allocation12], 0
    %s14 = scalar_lea.sflag [#allocation12], 1
    %15 = vsyncpa %s14, 0
    %16 = vsyncpa [#allocation7], 0
    %s17 = scalar_lea.sflag [#allocation7], 1
    %18 = vsyncpa %s17, 0
    loop: start=0, step=1, limit=6
    $region2: #{tpu_custom_call.1} parent=1 // loop_pre_header
      _
    $region3: #{tpu_custom_call.1} parent=1 // loop_header
      %s20 = sphi 0, %s24
      %p21 = scmp.ge.s32.totalorder %s20, 6
      %s27 = sphi 0, %s39
      %s28 = sphi 0, %s35
      %s29 = sphi 0, %s27
      %s30 = sphi 0, %s28
      %s31 = sphi 0, %s29
      %s32 = sphi 0, %s30
      %s40 = sphi 0, %s40
      %s42 = sphi 0, %s40
      %s43 = sphi 0, %s42
      %s57 = sphi 0, %s43
      %s65 = sphi 0, %s67
      %s68 = sphi 0, %s65
      %s69 = sphi 0, %s68
      %s85 = sphi 0, %s69
      %s91 = sphi 0, %s93
      %s94 = sphi 0, %s91
      %s95 = sphi 0, %s94
      %s111 = sphi 0, %s95
      %s117 = sphi 0, %s119
      %s120 = sphi 0, %s117
      %s121 = sphi 0, %s120
      %s137 = sphi 0, %s121
      %s143 = sphi 0, %s145
      %s146 = sphi 0, %s143
      %s147 = sphi 0, %s146
      %s163 = sphi 0, %s147
    $region4: #{tpu_custom_call.1} parent=1 // loop_header_branch
      %23 = sbr.rel (%p21) target = $region8
    $region5: #{tpu_custom_call.1} parent=1 // loop_body
      %s25 = ssub.s32 %s20, 1
      %s26 = ssub.s32 %s20, 2
      %s33 = sadd.s32 1, %s28
      %p34 = scmp.ge.s32.totalorder %s33, 2
      %s35 = scalar_select %p34, 0, %s33
      %s36 = sadd.s32 1, %s27
      %s37 = scalar_select %p34, %s36, %s27
      %p38 = scmp.ge.s32.totalorder %s37, 2
      %s39 = scalar_select %p38, 0, %s37
      %s41 = sadd.s32 %s40, 1
      %p44 = scmp.eq.s32.totalorder %s20, 3
      %p45 = scmp.ne.s32.totalorder %s40, %s42
      %p46 = scmp.eq.s32.totalorder %s20, 0
      %p47 = por %p45, %p46
      %p48 = scmp.ne.s32.totalorder %s40, %s42
      %p49 = scmp.eq.s32.totalorder %s25, 3
      %p50 = por %p48, %p49
      %p51 = scmp.ne.s32.totalorder %s42, %s43
      %p52 = scmp.eq.s32.totalorder %s25, 0
      %p53 = por %p51, %p52
      %p54 = scmp.ne.s32.totalorder %s42, %s43
      %p55 = scmp.eq.s32.totalorder %s26, 3
      %p56 = por %p54, %p55
      %p58 = scmp.ne.s32.totalorder %s43, %s57
      %p59 = scmp.eq.s32.totalorder %s26, 0
      %p60 = por %p58, %p59
      %s61 = ssub.s32 %s28, %s35
      %s62 = ssub.s32 %s27, %s39
      %s63 = sor.u32 %s61, %s62
      %p64 = scmp.eq.s32.totalorder %s63, 0
      %s66 = sadd.s32 %s65, 1
      %s67 = scalar_select %p64, %s65, %s66
      %p70 = pneg %p64
      %p71 = scmp.eq.s32.totalorder %s20, 3
      %p72 = por %p70, %p71
      %p73 = scmp.ne.s32.totalorder %s65, %s68
      %p74 = scmp.eq.s32.totalorder %s20, 0
      %p75 = por %p73, %p74
      %p76 = scmp.ne.s32.totalorder %s65, %s68
      %p77 = scmp.eq.s32.totalorder %s25, 3
      %p78 = por %p76, %p77
      %p79 = scmp.ne.s32.totalorder %s68, %s69
      %p80 = scmp.eq.s32.totalorder %s25, 0
      %p81 = por %p79, %p80
      %p82 = scmp.ne.s32.totalorder %s68, %s69
      %p83 = scmp.eq.s32.totalorder %s26, 3
      %p84 = por %p82, %p83
      %p86 = scmp.ne.s32.totalorder %s69, %s85
      %p87 = scmp.eq.s32.totalorder %s26, 0
      %p88 = por %p86, %p87
      %s89 = ssub.s32 %s27, %s39
      %p90 = scmp.eq.s32.totalorder %s89, 0
      %s92 = sadd.s32 %s91, 1
      %s93 = scalar_select %p90, %s91, %s92
      %p96 = pneg %p90
      %p97 = scmp.eq.s32.totalorder %s20, 3
      %p98 = por %p96, %p97
      %p99 = scmp.ne.s32.totalorder %s91, %s94
      %p100 = scmp.eq.s32.totalorder %s20, 0
      %p101 = por %p99, %p100
      %p102 = scmp.ne.s32.totalorder %s91, %s94
      %p103 = scmp.eq.s32.totalorder %s25, 3
      %p104 = por %p102, %p103
      %p105 = scmp.ne.s32.totalorder %s94, %s95
      %p106 = scmp.eq.s32.totalorder %s25, 0
      %p107 = por %p105, %p106
      %p108 = scmp.ne.s32.totalorder %s94, %s95
      %p109 = scmp.eq.s32.totalorder %s26, 3
      %p110 = por %p108, %p109
      %p112 = scmp.ne.s32.totalorder %s95, %s111
      %p113 = scmp.eq.s32.totalorder %s26, 0
      %p114 = por %p112, %p113
      %s115 = ssub.s32 %s27, %s39
      %p116 = scmp.eq.s32.totalorder %s115, 0
      %s118 = sadd.s32 %s117, 1
      %s119 = scalar_select %p116, %s117, %s118
      %p122 = pneg %p116
      %p123 = scmp.eq.s32.totalorder %s20, 3
      %p124 = por %p122, %p123
      %p125 = scmp.ne.s32.totalorder %s117, %s120
      %p126 = scmp.eq.s32.totalorder %s20, 0
      %p127 = por %p125, %p126
      %p128 = scmp.ne.s32.totalorder %s117, %s120
      %p129 = scmp.eq.s32.totalorder %s25, 3
      %p130 = por %p128, %p129
      %p131 = scmp.ne.s32.totalorder %s120, %s121
      %p132 = scmp.eq.s32.totalorder %s25, 0
      %p133 = por %p131, %p132
      %p134 = scmp.ne.s32.totalorder %s120, %s121
      %p135 = scmp.eq.s32.totalorder %s26, 3
      %p136 = por %p134, %p135
      %p138 = scmp.ne.s32.totalorder %s121, %s137
      %p139 = scmp.eq.s32.totalorder %s26, 0
      %p140 = por %p138, %p139
      %s141 = ssub.s32 %s27, %s39
      %p142 = scmp.eq.s32.totalorder %s141, 0
      %s144 = sadd.s32 %s143, 1
      %s145 = scalar_select %p142, %s143, %s144
      %p148 = pneg %p142
      %p149 = scmp.eq.s32.totalorder %s20, 3
      %p150 = por %p148, %p149
      %p151 = scmp.ne.s32.totalorder %s143, %s146
      %p152 = scmp.eq.s32.totalorder %s20, 0
      %p153 = por %p151, %p152
      %p154 = scmp.ne.s32.totalorder %s143, %s146
      %p155 = scmp.eq.s32.totalorder %s25, 3
      %p156 = por %p154, %p155
      %p157 = scmp.ne.s32.totalorder %s146, %s147
      %p158 = scmp.eq.s32.totalorder %s25, 0
      %p159 = por %p157, %p158
      %p160 = scmp.ne.s32.totalorder %s146, %s147
      %p161 = scmp.eq.s32.totalorder %s26, 3
      %p162 = por %p160, %p161
      %p164 = scmp.ne.s32.totalorder %s147, %s163
      %p165 = scmp.eq.s32.totalorder %s26, 0
      %p166 = por %p164, %p165
      %p167 = scmp.le.s32.totalorder 1, %s20
      %p168 = scmp.lt.s32.totalorder %s20, 5
      %p169 = pnand %p167, %p168
      %p170 = pneg %p169
      // Predicated region
      $region9: #{tpu_custom_call.1} parent=5 // pred_check
        _
      $region10: #{tpu_custom_call.1} parent=5 // pred_check_branch
        %172 = sbr.rel (%p169) target = $region12
      $region11: #{tpu_custom_call.1} parent=5 // pred_region
        %s173 = ssub.s32 %s20, 1
        // Predicated region
        $region13: #{tpu_custom_call.1} parent=11 // pred_check
          %p174 = pneg %p53
        $region14: #{tpu_custom_call.1} parent=11 // pred_check_branch
          %176 = sbr.rel (%p174) target = $region16
        $region15: #{tpu_custom_call.1} parent=11 // pred_region
          %s178 = ssub.s32 2048, 2048
          %179 = vsyncadd [#allocation6], %s178
          %s181 = sshll.u32 [#allocation5], 4
          %s182 = int_to_ptr.vmem [resolvable:$true] %s181
          %184 = dma.hbm_to_vmem [thread:$0]  %s0, 2048, %s182, [#allocation6]
        $region16: #{tpu_custom_call.1} parent=11 // pred_fallthru
          _
      $region12: #{tpu_custom_call.1} parent=5 // pred_fallthru
        _
      %p185 = scmp.lt.s32.totalorder %s20, 4
      // Predicated region
      $region17: #{tpu_custom_call.1} parent=5 // pred_check
        %p186 = pneg %p185
      $region18: #{tpu_custom_call.1} parent=5 // pred_check_branch
        %188 = sbr.rel (%p186) target = $region20
      $region19: #{tpu_custom_call.1} parent=5 // pred_region
        // Predicated region
        $region21: #{tpu_custom_call.1} parent=19 // pred_check
          %p189 = pneg %p75
        $region22: #{tpu_custom_call.1} parent=19 // pred_check_branch
          %191 = sbr.rel (%p189) target = $region24
        $region23: #{tpu_custom_call.1} parent=19 // pred_region
          %s192 = sand.u32 %s20, 1
          %s193 = scalar_lea.sflag [#allocation9], %s192
          %s194 = sand.u32 %s65, 1
          %s195 = smul.addr %s194, 2048
          %s196 = scalar_lea.vmem [#allocation8], %s195
          %s197 = smul.u32 128, %s28
          %s198 = smul.u32 4, %s27
          %s200 = ssub.s32 32768, 32768
          %201 = vsyncadd %s193, %s200
          %s202 = smul.addr %s197, 8
          %s203 = sadd.s32 %s198, %s202
          %s204 = smul.addr %s203, 64
          %s205 = scalar_lea.hbm %s1, %s204
          %s206 = sshll.u32 %s196, 4
          %s207 = int_to_ptr.vmem [resolvable:$true] %s206
          %212 = dma.hbm_to_vmem [thread:$0]  %s205, 32768, %s207, %s193, 512, 256, 16
        $region24: #{tpu_custom_call.1} parent=19 // pred_fallthru
          _
        // Predicated region
        $region25: #{tpu_custom_call.1} parent=19 // pred_check
          %p213 = pneg %p101
        $region26: #{tpu_custom_call.1} parent=19 // pred_check_branch
          %215 = sbr.rel (%p213) target = $region28
        $region27: #{tpu_custom_call.1} parent=19 // pred_region
          %s216 = sand.u32 %s20, 1
          %s217 = scalar_lea.sflag [#allocation9], %s216
          %s218 = sand.u32 %s91, 1
          %s219 = smul.addr %s218, 4
          %s220 = scalar_lea.vmem [#allocation10], %s219
          %s221 = smul.u32 4, %s27
          %s223 = ssub.s32 64, 64
          %224 = vsyncadd %s217, %s223
          %s225 = smul.addr %s221, 16
          %s226 = scalar_lea.hbm %s2, %s225
          %s228 = sshll.u32 %s220, 4
          %s229 = int_to_ptr.vmem [resolvable:$true] %s228
          %231 = dma.hbm_to_vmem [thread:$0]  %s226, 64, %s229, %s217
        $region28: #{tpu_custom_call.1} parent=19 // pred_fallthru
          _
        // Predicated region
        $region29: #{tpu_custom_call.1} parent=19 // pred_check
          %p232 = pneg %p127
        $region30: #{tpu_custom_call.1} parent=19 // pred_check_branch
          %234 = sbr.rel (%p232) target = $region32
        $region31: #{tpu_custom_call.1} parent=19 // pred_region
          %s235 = sand.u32 %s117, 1
          %s236 = scalar_lea.sflag [#allocation12], %s235
          %s237 = sand.u32 %s117, 1
          %s238 = smul.addr %s237, 512
          %s239 = scalar_lea.vmem [#allocation11], %s238
          %s240 = smul.u32 64, %s27
          %s242 = ssub.s32 8192, 8192
          %243 = vsyncadd %s236, %s242
          %s244 = smul.addr %s240, 2
          %s245 = smul.addr %s244, 64
          %s246 = scalar_lea.hbm %s3, %s245
          %s247 = sshll.u32 %s239, 4
          %s248 = int_to_ptr.vmem [resolvable:$true] %s247
          %253 = dma.hbm_to_vmem [thread:$0]  %s246, 8192, %s248, %s236, 128, 128, 8
        $region32: #{tpu_custom_call.1} parent=19 // pred_fallthru
          _
      $region20: #{tpu_custom_call.1} parent=5 // pred_fallthru
        _
      %p254 = scmp.le.s32.totalorder 1, %s20
      %p255 = scmp.lt.s32.totalorder %s20, 5
      %p256 = pnand %p254, %p255
      %p257 = pneg %p256
      // Predicated region
      $region33: #{tpu_custom_call.1} parent=5 // pred_check
        _
      $region34: #{tpu_custom_call.1} parent=5 // pred_check_branch
        %259 = sbr.rel (%p256) target = $region36
      $region35: #{tpu_custom_call.1} parent=5 // pred_region
        %s260 = ssub.s32 %s20, 1
        // Predicated region
        $region37: #{tpu_custom_call.1} parent=35 // pred_check
          %p261 = pneg %p53
        $region38: #{tpu_custom_call.1} parent=35 // pred_check_branch
          %263 = sbr.rel (%p261) target = $region40
        $region39: #{tpu_custom_call.1} parent=35 // pred_region
          %264 = dma.done [#allocation6], 2048
        $region40: #{tpu_custom_call.1} parent=35 // pred_fallthru
          _
        %s265 = sand.u32 %s25, 1
        %s266 = scalar_lea.sflag [#allocation9], %s265
        %s267 = sand.u32 %s68, 1
        %s268 = smul.addr %s267, 2048
        %s269 = scalar_lea.vmem [#allocation8], %s268
        // Predicated region
        $region41: #{tpu_custom_call.1} parent=35 // pred_check
          %p270 = pneg %p81
        $region42: #{tpu_custom_call.1} parent=35 // pred_check_branch
          %272 = sbr.rel (%p270) target = $region44
        $region43: #{tpu_custom_call.1} parent=35 // pred_region
          %273 = dma.done %s266, 32768
        $region44: #{tpu_custom_call.1} parent=35 // pred_fallthru
          _
        %s274 = sand.u32 %s25, 1
        %s275 = scalar_lea.sflag [#allocation9], %s274
        %s276 = sand.u32 %s94, 1
        %s277 = smul.addr %s276, 4
        %s278 = scalar_lea.vmem [#allocation10], %s277
        // Predicated region
        $region45: #{tpu_custom_call.1} parent=35 // pred_check
          %p279 = pneg %p107
        $region46: #{tpu_custom_call.1} parent=35 // pred_check_branch
          %281 = sbr.rel (%p279) target = $region48
        $region47: #{tpu_custom_call.1} parent=35 // pred_region
          %282 = dma.done %s275, 64
        $region48: #{tpu_custom_call.1} parent=35 // pred_fallthru
          _
        %s283 = sand.u32 %s120, 1
        %s284 = scalar_lea.sflag [#allocation12], %s283
        %s285 = sand.u32 %s120, 1
        %s286 = smul.addr %s285, 512
        %s287 = scalar_lea.vmem [#allocation11], %s286
        // Predicated region
        $region49: #{tpu_custom_call.1} parent=35 // pred_check
          %p288 = pneg %p133
        $region50: #{tpu_custom_call.1} parent=35 // pred_check_branch
          %290 = sbr.rel (%p288) target = $region52
        $region51: #{tpu_custom_call.1} parent=35 // pred_region
          %291 = dma.done %s284, 8192
        $region52: #{tpu_custom_call.1} parent=35 // pred_fallthru
          _
        %p292 = pneg %p53
        %p293 = pneg %p50
        %s294 = sand.u32 %s25, 1
        %s295 = scalar_lea.sflag [#allocation9], %s294
        %s296 = sand.u32 %s68, 1
        %s297 = smul.addr %s296, 2048
        %s298 = scalar_lea.vmem [#allocation8], %s297
        %p299 = pneg %p81
        %p300 = pneg %p78
        %s301 = sand.u32 %s25, 1
        %s302 = scalar_lea.sflag [#allocation9], %s301
        %s303 = sand.u32 %s94, 1
        %s304 = smul.addr %s303, 4
        %s305 = scalar_lea.vmem [#allocation10], %s304
        %p306 = pneg %p107
        %p307 = pneg %p104
        %s308 = sand.u32 %s120, 1
        %s309 = scalar_lea.sflag [#allocation12], %s308
        %s310 = sand.u32 %s120, 1
        %s311 = smul.addr %s310, 512
        %s312 = scalar_lea.vmem [#allocation11], %s311
        %p313 = pneg %p133
        %p314 = pneg %p130
        %p315 = pneg %p159
        %p316 = pneg %p156
        %s317 = sand.u32 %s146, 1
        %s318 = scalar_lea.sflag [#allocation7], %s317
        %s319 = sand.u32 %s146, 1
        %s320 = smul.addr %s319, 16
        %s321 = scalar_lea.vmem [#allocation13], %s320
        %s322 = smul.u32 128, %s30
        %s323 = smul.u32 4, %s29
        %s324 = smul.u32 4, %s29
        %s325 = smul.u32 64, %s29
        %p326 = scmp.eq.s32.totalorder %s30, 0
        // Predicated region
        $region53: #{tpu_custom_call.1} parent=35 // pred_check
          %p327 = pneg %p326
        $region54: #{tpu_custom_call.1} parent=35 // pred_check_branch
          %329 = sbr.rel (%p327) target = $region56
        $region55: #{tpu_custom_call.1} parent=35 // pred_region
          %v330 = vld [vmem:[#allocation5] sm:$0xff]
          %v331 = vld [vmem:[#allocation5 + $0x8] sm:$0xff]
          %v332 = vld [vmem:[#allocation5 + $0x10] sm:$0xff]
          %v333 = vld [vmem:[#allocation5 + $0x18] sm:$0xff]
          %v334 = vld [vmem:[#allocation5 + $0x20] sm:$0xff]
          %v335 = vld [vmem:[#allocation5 + $0x28] sm:$0xff]
          %v336 = vld [vmem:[#allocation5 + $0x30] sm:$0xff]
          %v337 = vld [vmem:[#allocation5 + $0x38] sm:$0xff]
          %v338 = vld [vmem:[#allocation5 + $0x40] sm:$0xff]
          %v339 = vld [vmem:[#allocation5 + $0x48] sm:$0xff]
          %v340 = vld [vmem:[#allocation5 + $0x50] sm:$0xff]
          %v341 = vld [vmem:[#allocation5 + $0x58] sm:$0xff]
          %v342 = vld [vmem:[#allocation5 + $0x60] sm:$0xff]
          %v343 = vld [vmem:[#allocation5 + $0x68] sm:$0xff]
          %v344 = vld [vmem:[#allocation5 + $0x70] sm:$0xff]
          %v345 = vld [vmem:[#allocation5 + $0x78] sm:$0xff]
          %v346 = vadd.f32 %v330, %v331
          %v347 = vadd.f32 %v346, %v332
          %v348 = vadd.f32 %v347, %v333
          %v349 = vadd.f32 %v348, %v334
          %v350 = vadd.f32 %v349, %v335
          %v351 = vadd.f32 %v350, %v336
          %v352 = vadd.f32 %v351, %v337
          %v353 = vadd.f32 %v352, %v338
          %v354 = vadd.f32 %v353, %v339
          %v355 = vadd.f32 %v354, %v340
          %v356 = vadd.f32 %v355, %v341
          %v357 = vadd.f32 %v356, %v342
          %v358 = vadd.f32 %v357, %v343
          %v359 = vadd.f32 %v358, %v344
          %v360 = vadd.f32 %v359, %v345
          %361 = vadd.xlane.f32.xlu0 %v360
          %v362 = vpop.xlane.xlu0 %361
          %v363 = vrcp.pop 2048.0
          %v364 = vmul.f32 %v362, %v363
          %v365 = vsub.f32 %v330, %v364
          %v366 = vsub.f32 %v331, %v364
          %v367 = vsub.f32 %v332, %v364
          %v368 = vsub.f32 %v333, %v364
          %v369 = vsub.f32 %v334, %v364
          %v370 = vsub.f32 %v335, %v364
          %v371 = vsub.f32 %v336, %v364
          %v372 = vsub.f32 %v337, %v364
          %v373 = vsub.f32 %v338, %v364
          %v374 = vsub.f32 %v339, %v364
          %v375 = vsub.f32 %v340, %v364
          %v376 = vsub.f32 %v341, %v364
          %v377 = vsub.f32 %v342, %v364
          %v378 = vsub.f32 %v343, %v364
          %v379 = vsub.f32 %v344, %v364
          %v380 = vsub.f32 %v345, %v364
          %v381 = vmul.f32 %v365, %v365
          %v382 = vmul.f32 %v366, %v366
          %v383 = vmul.f32 %v367, %v367
          %v384 = vmul.f32 %v368, %v368
          %v385 = vmul.f32 %v369, %v369
          %v386 = vmul.f32 %v370, %v370
          %v387 = vmul.f32 %v371, %v371
          %v388 = vmul.f32 %v372, %v372
          %v389 = vmul.f32 %v373, %v373
          %v390 = vmul.f32 %v374, %v374
          %v391 = vmul.f32 %v375, %v375
          %v392 = vmul.f32 %v376, %v376
          %v393 = vmul.f32 %v377, %v377
          %v394 = vmul.f32 %v378, %v378
          %v395 = vmul.f32 %v379, %v379
          %v396 = vmul.f32 %v380, %v380
          %v397 = vadd.f32 %v381, %v382
          %v398 = vadd.f32 %v397, %v383
          %v399 = vadd.f32 %v398, %v384
          %v400 = vadd.f32 %v399, %v385
          %v401 = vadd.f32 %v400, %v386
          %v402 = vadd.f32 %v401, %v387
          %v403 = vadd.f32 %v402, %v388
          %v404 = vadd.f32 %v403, %v389
          %v405 = vadd.f32 %v404, %v390
          %v406 = vadd.f32 %v405, %v391
          %v407 = vadd.f32 %v406, %v392
          %v408 = vadd.f32 %v407, %v393
          %v409 = vadd.f32 %v408, %v394
          %v410 = vadd.f32 %v409, %v395
          %v411 = vadd.f32 %v410, %v396
          %412 = vadd.xlane.f32.xlu0 %v411
          %v413 = vpop.xlane.xlu0 %412
          %v414 = vrcp.pop 2047.0
          %v415 = vmul.f32 %v413, %v414
          %vm416 = vcmask 7168
          %417 = vst.msk [vmem:[#allocation3] sm:$0xff] %vm416, %v364
          %v418 = vrsqrt.pop %v415
          %v419 = vmul.f32 %v418, 0.02
          %420 = vst.msk [vmem:[#allocation4] sm:$0xff] %vm416, %v419
          %421 = vst [vmem:[#allocation2] sm:$0xff] 0.0
          %422 = vst [vmem:[#allocation2 + $0x8] sm:$0xff] 0.0
          %423 = vst [vmem:[#allocation2 + $0x10] sm:$0xff] 0.0
          %424 = vst [vmem:[#allocation2 + $0x18] sm:$0xff] 0.0
        $region56: #{tpu_custom_call.1} parent=35 // pred_fallthru
          _
        %s425 = smul.u32 %s30, 1024
        %s426 = sshra.s32 %s425, 7
        %s427 = sand.u32 %s425, 127
        %s428 = smul.addr %s426, 8
        %s429 = scalar_lea.vmem [#allocation5], %s428
        %v430 = vld [vmem:[%s429] sm:$0xff]
        %v431 = vld [vmem:[%s429 + $0x8] sm:$0xff]
        %v432 = vld [vmem:[%s429 + $0x10] sm:$0xff]
        %v433 = vld [vmem:[%s429 + $0x18] sm:$0xff]
        %v434 = vld [vmem:[%s429 + $0x20] sm:$0xff]
        %v435 = vld [vmem:[%s429 + $0x28] sm:$0xff]
        %v436 = vld [vmem:[%s429 + $0x30] sm:$0xff]
        %v437 = vld [vmem:[%s429 + $0x38] sm:$0xff]
        %v438 = vld [vmem:[#allocation3] sm:$0xff]
        %440 = vset.pattern.permute.xlu0 0
        %441 = vperm.xlu0 %440, %v438
        %v442 = vpop.permute.xlu0 %441
        %v444 = vsub.f32 %v430, %v442
        %v445 = vsub.f32 %v431, %v442
        %v446 = vsub.f32 %v432, %v442
        %v447 = vsub.f32 %v433, %v442
        %v448 = vsub.f32 %v434, %v442
        %v449 = vsub.f32 %v435, %v442
        %v450 = vsub.f32 %v436, %v442
        %v451 = vsub.f32 %v437, %v442
        %v452 = vld [vmem:[#allocation4] sm:$0xff]
        %454 = vset.pattern.permute.xlu0 0
        %455 = vperm.xlu0 %454, %v452
        %v456 = vpop.permute.xlu0 %455
        %v458 = vmul.f32 %v444, %v456
        %v459 = vmul.f32 %v445, %v456
        %v460 = vmul.f32 %v446, %v456
        %v461 = vmul.f32 %v447, %v456
        %v462 = vmul.f32 %v448, %v456
        %v463 = vmul.f32 %v449, %v456
        %v464 = vmul.f32 %v450, %v456
        %v465 = vmul.f32 %v451, %v456
        %v466 = vld [vmem:[%s269] sm:$0xff]
        %v467 = vld [vmem:[%s269 + $0x8] sm:$0xff]
        %v468 = vld [vmem:[%s269 + $0x10] sm:$0xff]
        %v469 = vld [vmem:[%s269 + $0x18] sm:$0xff]
        %v470 = vld [vmem:[%s269 + $0x20] sm:$0xff]
        %v471 = vld [vmem:[%s269 + $0x28] sm:$0xff]
        %v472 = vld [vmem:[%s269 + $0x30] sm:$0xff]
        %v473 = vld [vmem:[%s269 + $0x38] sm:$0xff]
        %v474 = vld [vmem:[%s269 + $0x40] sm:$0xff]
        %v475 = vld [vmem:[%s269 + $0x48] sm:$0xff]
        %v476 = vld [vmem:[%s269 + $0x50] sm:$0xff]
        %v477 = vld [vmem:[%s269 + $0x58] sm:$0xff]
        %v478 = vld [vmem:[%s269 + $0x60] sm:$0xff]
        %v479 = vld [vmem:[%s269 + $0x68] sm:$0xff]
        %v480 = vld [vmem:[%s269 + $0x70] sm:$0xff]
        %v481 = vld [vmem:[%s269 + $0x78] sm:$0xff]
        %v482 = vld [vmem:[%s269 + $0x80] sm:$0xff]
        %v483 = vld [vmem:[%s269 + $0x88] sm:$0xff]
        %v484 = vld [vmem:[%s269 + $0x90] sm:$0xff]
        %v485 = vld [vmem:[%s269 + $0x98] sm:$0xff]
        %v486 = vld [vmem:[%s269 + $0xa0] sm:$0xff]
        %v487 = vld [vmem:[%s269 + $0xa8] sm:$0xff]
        %v488 = vld [vmem:[%s269 + $0xb0] sm:$0xff]
        %v489 = vld [vmem:[%s269 + $0xb8] sm:$0xff]
        %v490 = vld [vmem:[%s269 + $0xc0] sm:$0xff]
        %v491 = vld [vmem:[%s269 + $0xc8] sm:$0xff]
        %v492 = vld [vmem:[%s269 + $0xd0] sm:$0xff]
        %v493 = vld [vmem:[%s269 + $0xd8] sm:$0xff]
        %v494 = vld [vmem:[%s269 + $0xe0] sm:$0xff]
        %v495 = vld [vmem:[%s269 + $0xe8] sm:$0xff]
        %v496 = vld [vmem:[%s269 + $0xf0] sm:$0xff]
        %v497 = vld [vmem:[%s269 + $0xf8] sm:$0xff]
        %v498 = vld [vmem:[%s269 + $0x100] sm:$0xff]
        %v499 = vld [vmem:[%s269 + $0x108] sm:$0xff]
        %v500 = vld [vmem:[%s269 + $0x110] sm:$0xff]
        %v501 = vld [vmem:[%s269 + $0x118] sm:$0xff]
        %v502 = vld [vmem:[%s269 + $0x120] sm:$0xff]
        %v503 = vld [vmem:[%s269 + $0x128] sm:$0xff]
        %v504 = vld [vmem:[%s269 + $0x130] sm:$0xff]
        %v505 = vld [vmem:[%s269 + $0x138] sm:$0xff]
        %v506 = vld [vmem:[%s269 + $0x140] sm:$0xff]
        %v507 = vld [vmem:[%s269 + $0x148] sm:$0xff]
        %v508 = vld [vmem:[%s269 + $0x150] sm:$0xff]
        %v509 = vld [vmem:[%s269 + $0x158] sm:$0xff]
        %v510 = vld [vmem:[%s269 + $0x160] sm:$0xff]
        %v511 = vld [vmem:[%s269 + $0x168] sm:$0xff]
        %v512 = vld [vmem:[%s269 + $0x170] sm:$0xff]
        %v513 = vld [vmem:[%s269 + $0x178] sm:$0xff]
        %v514 = vld [vmem:[%s269 + $0x180] sm:$0xff]
        %v515 = vld [vmem:[%s269 + $0x188] sm:$0xff]
        %v516 = vld [vmem:[%s269 + $0x190] sm:$0xff]
        %v517 = vld [vmem:[%s269 + $0x198] sm:$0xff]
        %v518 = vld [vmem:[%s269 + $0x1a0] sm:$0xff]
        %v519 = vld [vmem:[%s269 + $0x1a8] sm:$0xff]
        %v520 = vld [vmem:[%s269 + $0x1b0] sm:$0xff]
        %v521 = vld [vmem:[%s269 + $0x1b8] sm:$0xff]
        %v522 = vld [vmem:[%s269 + $0x1c0] sm:$0xff]
        %v523 = vld [vmem:[%s269 + $0x1c8] sm:$0xff]
        %v524 = vld [vmem:[%s269 + $0x1d0] sm:$0xff]
        %v525 = vld [vmem:[%s269 + $0x1d8] sm:$0xff]
        %v526 = vld [vmem:[%s269 + $0x1e0] sm:$0xff]
        %v527 = vld [vmem:[%s269 + $0x1e8] sm:$0xff]
        %v528 = vld [vmem:[%s269 + $0x1f0] sm:$0xff]
        %v529 = vld [vmem:[%s269 + $0x1f8] sm:$0xff]
        %v530 = vld [vmem:[%s269 + $0x200] sm:$0xff]
        %v531 = vld [vmem:[%s269 + $0x208] sm:$0xff]
        %v532 = vld [vmem:[%s269 + $0x210] sm:$0xff]
        %v533 = vld [vmem:[%s269 + $0x218] sm:$0xff]
        %v534 = vld [vmem:[%s269 + $0x220] sm:$0xff]
        %v535 = vld [vmem:[%s269 + $0x228] sm:$0xff]
        %v536 = vld [vmem:[%s269 + $0x230] sm:$0xff]
        %v537 = vld [vmem:[%s269 + $0x238] sm:$0xff]
        %v538 = vld [vmem:[%s269 + $0x240] sm:$0xff]
        %v539 = vld [vmem:[%s269 + $0x248] sm:$0xff]
        %v540 = vld [vmem:[%s269 + $0x250] sm:$0xff]
        %v541 = vld [vmem:[%s269 + $0x258] sm:$0xff]
        %v542 = vld [vmem:[%s269 + $0x260] sm:$0xff]
        %v543 = vld [vmem:[%s269 + $0x268] sm:$0xff]
        %v544 = vld [vmem:[%s269 + $0x270] sm:$0xff]
        %v545 = vld [vmem:[%s269 + $0x278] sm:$0xff]
        %v546 = vld [vmem:[%s269 + $0x280] sm:$0xff]
        %v547 = vld [vmem:[%s269 + $0x288] sm:$0xff]
        %v548 = vld [vmem:[%s269 + $0x290] sm:$0xff]
        %v549 = vld [vmem:[%s269 + $0x298] sm:$0xff]
        %v550 = vld [vmem:[%s269 + $0x2a0] sm:$0xff]
        %v551 = vld [vmem:[%s269 + $0x2a8] sm:$0xff]
        %v552 = vld [vmem:[%s269 + $0x2b0] sm:$0xff]
        %v553 = vld [vmem:[%s269 + $0x2b8] sm:$0xff]
        %v554 = vld [vmem:[%s269 + $0x2c0] sm:$0xff]
        %v555 = vld [vmem:[%s269 + $0x2c8] sm:$0xff]
        %v556 = vld [vmem:[%s269 + $0x2d0] sm:$0xff]
        %v557 = vld [vmem:[%s269 + $0x2d8] sm:$0xff]
        %v558 = vld [vmem:[%s269 + $0x2e0] sm:$0xff]
        %v559 = vld [vmem:[%s269 + $0x2e8] sm:$0xff]
        %v560 = vld [vmem:[%s269 + $0x2f0] sm:$0xff]
        %v561 = vld [vmem:[%s269 + $0x2f8] sm:$0xff]
        %v562 = vld [vmem:[%s269 + $0x300] sm:$0xff]
        %v563 = vld [vmem:[%s269 + $0x308] sm:$0xff]
        %v564 = vld [vmem:[%s269 + $0x310] sm:$0xff]
        %v565 = vld [vmem:[%s269 + $0x318] sm:$0xff]
        %v566 = vld [vmem:[%s269 + $0x320] sm:$0xff]
        %v567 = vld [vmem:[%s269 + $0x328] sm:$0xff]
        %v568 = vld [vmem:[%s269 + $0x330] sm:$0xff]
        %v569 = vld [vmem:[%s269 + $0x338] sm:$0xff]
        %v570 = vld [vmem:[%s269 + $0x340] sm:$0xff]
        %v571 = vld [vmem:[%s269 + $0x348] sm:$0xff]
        %v572 = vld [vmem:[%s269 + $0x350] sm:$0xff]
        %v573 = vld [vmem:[%s269 + $0x358] sm:$0xff]
        %v574 = vld [vmem:[%s269 + $0x360] sm:$0xff]
        %v575 = vld [vmem:[%s269 + $0x368] sm:$0xff]
        %v576 = vld [vmem:[%s269 + $0x370] sm:$0xff]
        %v577 = vld [vmem:[%s269 + $0x378] sm:$0xff]
        %v578 = vld [vmem:[%s269 + $0x380] sm:$0xff]
        %v579 = vld [vmem:[%s269 + $0x388] sm:$0xff]
        %v580 = vld [vmem:[%s269 + $0x390] sm:$0xff]
        %v581 = vld [vmem:[%s269 + $0x398] sm:$0xff]
        %v582 = vld [vmem:[%s269 + $0x3a0] sm:$0xff]
        %v583 = vld [vmem:[%s269 + $0x3a8] sm:$0xff]
        %v584 = vld [vmem:[%s269 + $0x3b0] sm:$0xff]
        %v585 = vld [vmem:[%s269 + $0x3b8] sm:$0xff]
        %v586 = vld [vmem:[%s269 + $0x3c0] sm:$0xff]
        %v587 = vld [vmem:[%s269 + $0x3c8] sm:$0xff]
        %v588 = vld [vmem:[%s269 + $0x3d0] sm:$0xff]
        %v589 = vld [vmem:[%s269 + $0x3d8] sm:$0xff]
        %v590 = vld [vmem:[%s269 + $0x3e0] sm:$0xff]
        %v591 = vld [vmem:[%s269 + $0x3e8] sm:$0xff]
        %v592 = vld [vmem:[%s269 + $0x3f0] sm:$0xff]
        %v593 = vld [vmem:[%s269 + $0x3f8] sm:$0xff]
        %v594 = vld [vmem:[%s269 + $0x400] sm:$0xff]
        %v595 = vld [vmem:[%s269 + $0x408] sm:$0xff]
        %v596 = vld [vmem:[%s269 + $0x410] sm:$0xff]
        %v597 = vld [vmem:[%s269 + $0x418] sm:$0xff]
        %v598 = vld [vmem:[%s269 + $0x420] sm:$0xff]
        %v599 = vld [vmem:[%s269 + $0x428] sm:$0xff]
        %v600 = vld [vmem:[%s269 + $0x430] sm:$0xff]
        %v601 = vld [vmem:[%s269 + $0x438] sm:$0xff]
        %v602 = vld [vmem:[%s269 + $0x440] sm:$0xff]
        %v603 = vld [vmem:[%s269 + $0x448] sm:$0xff]
        %v604 = vld [vmem:[%s269 + $0x450] sm:$0xff]
        %v605 = vld [vmem:[%s269 + $0x458] sm:$0xff]
        %v606 = vld [vmem:[%s269 + $0x460] sm:$0xff]
        %v607 = vld [vmem:[%s269 + $0x468] sm:$0xff]
        %v608 = vld [vmem:[%s269 + $0x470] sm:$0xff]
        %v609 = vld [vmem:[%s269 + $0x478] sm:$0xff]
        %v610 = vld [vmem:[%s269 + $0x480] sm:$0xff]
        %v611 = vld [vmem:[%s269 + $0x488] sm:$0xff]
        %v612 = vld [vmem:[%s269 + $0x490] sm:$0xff]
        %v613 = vld [vmem:[%s269 + $0x498] sm:$0xff]
        %v614 = vld [vmem:[%s269 + $0x4a0] sm:$0xff]
        %v615 = vld [vmem:[%s269 + $0x4a8] sm:$0xff]
        %v616 = vld [vmem:[%s269 + $0x4b0] sm:$0xff]
        %v617 = vld [vmem:[%s269 + $0x4b8] sm:$0xff]
        %v618 = vld [vmem:[%s269 + $0x4c0] sm:$0xff]
        %v619 = vld [vmem:[%s269 + $0x4c8] sm:$0xff]
        %v620 = vld [vmem:[%s269 + $0x4d0] sm:$0xff]
        %v621 = vld [vmem:[%s269 + $0x4d8] sm:$0xff]
        %v622 = vld [vmem:[%s269 + $0x4e0] sm:$0xff]
        %v623 = vld [vmem:[%s269 + $0x4e8] sm:$0xff]
        %v624 = vld [vmem:[%s269 + $0x4f0] sm:$0xff]
        %v625 = vld [vmem:[%s269 + $0x4f8] sm:$0xff]
        %v626 = vld [vmem:[%s269 + $0x500] sm:$0xff]
        %v627 = vld [vmem:[%s269 + $0x508] sm:$0xff]
        %v628 = vld [vmem:[%s269 + $0x510] sm:$0xff]
        %v629 = vld [vmem:[%s269 + $0x518] sm:$0xff]
        %v630 = vld [vmem:[%s269 + $0x520] sm:$0xff]
        %v631 = vld [vmem:[%s269 + $0x528] sm:$0xff]
        %v632 = vld [vmem:[%s269 + $0x530] sm:$0xff]
        %v633 = vld [vmem:[%s269 + $0x538] sm:$0xff]
        %v634 = vld [vmem:[%s269 + $0x540] sm:$0xff]
        %v635 = vld [vmem:[%s269 + $0x548] sm:$0xff]
        %v636 = vld [vmem:[%s269 + $0x550] sm:$0xff]
        %v637 = vld [vmem:[%s269 + $0x558] sm:$0xff]
        %v638 = vld [vmem:[%s269 + $0x560] sm:$0xff]
        %v639 = vld [vmem:[%s269 + $0x568] sm:$0xff]
        %v640 = vld [vmem:[%s269 + $0x570] sm:$0xff]
        %v641 = vld [vmem:[%s269 + $0x578] sm:$0xff]
        %v642 = vld [vmem:[%s269 + $0x580] sm:$0xff]
        %v643 = vld [vmem:[%s269 + $0x588] sm:$0xff]
        %v644 = vld [vmem:[%s269 + $0x590] sm:$0xff]
        %v645 = vld [vmem:[%s269 + $0x598] sm:$0xff]
        %v646 = vld [vmem:[%s269 + $0x5a0] sm:$0xff]
        %v647 = vld [vmem:[%s269 + $0x5a8] sm:$0xff]
        %v648 = vld [vmem:[%s269 + $0x5b0] sm:$0xff]
        %v649 = vld [vmem:[%s269 + $0x5b8] sm:$0xff]
        %v650 = vld [vmem:[%s269 + $0x5c0] sm:$0xff]
        %v651 = vld [vmem:[%s269 + $0x5c8] sm:$0xff]
        %v652 = vld [vmem:[%s269 + $0x5d0] sm:$0xff]
        %v653 = vld [vmem:[%s269 + $0x5d8] sm:$0xff]
        %v654 = vld [vmem:[%s269 + $0x5e0] sm:$0xff]
        %v655 = vld [vmem:[%s269 + $0x5e8] sm:$0xff]
        %v656 = vld [vmem:[%s269 + $0x5f0] sm:$0xff]
        %v657 = vld [vmem:[%s269 + $0x5f8] sm:$0xff]
        %v658 = vld [vmem:[%s269 + $0x600] sm:$0xff]
        %v659 = vld [vmem:[%s269 + $0x608] sm:$0xff]
        %v660 = vld [vmem:[%s269 + $0x610] sm:$0xff]
        %v661 = vld [vmem:[%s269 + $0x618] sm:$0xff]
        %v662 = vld [vmem:[%s269 + $0x620] sm:$0xff]
        %v663 = vld [vmem:[%s269 + $0x628] sm:$0xff]
        %v664 = vld [vmem:[%s269 + $0x630] sm:$0xff]
        %v665 = vld [vmem:[%s269 + $0x638] sm:$0xff]
        %v666 = vld [vmem:[%s269 + $0x640] sm:$0xff]
        %v667 = vld [vmem:[%s269 + $0x648] sm:$0xff]
        %v668 = vld [vmem:[%s269 + $0x650] sm:$0xff]
        %v669 = vld [vmem:[%s269 + $0x658] sm:$0xff]
        %v670 = vld [vmem:[%s269 + $0x660] sm:$0xff]
        %v671 = vld [vmem:[%s269 + $0x668] sm:$0xff]
        %v672 = vld [vmem:[%s269 + $0x670] sm:$0xff]
        %v673 = vld [vmem:[%s269 + $0x678] sm:$0xff]
        %v674 = vld [vmem:[%s269 + $0x680] sm:$0xff]
        %v675 = vld [vmem:[%s269 + $0x688] sm:$0xff]
        %v676 = vld [vmem:[%s269 + $0x690] sm:$0xff]
        %v677 = vld [vmem:[%s269 + $0x698] sm:$0xff]
        %v678 = vld [vmem:[%s269 + $0x6a0] sm:$0xff]
        %v679 = vld [vmem:[%s269 + $0x6a8] sm:$0xff]
        %v680 = vld [vmem:[%s269 + $0x6b0] sm:$0xff]
        %v681 = vld [vmem:[%s269 + $0x6b8] sm:$0xff]
        %v682 = vld [vmem:[%s269 + $0x6c0] sm:$0xff]
        %v683 = vld [vmem:[%s269 + $0x6c8] sm:$0xff]
        %v684 = vld [vmem:[%s269 + $0x6d0] sm:$0xff]
        %v685 = vld [vmem:[%s269 + $0x6d8] sm:$0xff]
        %v686 = vld [vmem:[%s269 + $0x6e0] sm:$0xff]
        %v687 = vld [vmem:[%s269 + $0x6e8] sm:$0xff]
        %v688 = vld [vmem:[%s269 + $0x6f0] sm:$0xff]
        %v689 = vld [vmem:[%s269 + $0x6f8] sm:$0xff]
        %v690 = vld [vmem:[%s269 + $0x700] sm:$0xff]
        %v691 = vld [vmem:[%s269 + $0x708] sm:$0xff]
        %v692 = vld [vmem:[%s269 + $0x710] sm:$0xff]
        %v693 = vld [vmem:[%s269 + $0x718] sm:$0xff]
        %v694 = vld [vmem:[%s269 + $0x720] sm:$0xff]
        %v695 = vld [vmem:[%s269 + $0x728] sm:$0xff]
        %v696 = vld [vmem:[%s269 + $0x730] sm:$0xff]
        %v697 = vld [vmem:[%s269 + $0x738] sm:$0xff]
        %v698 = vld [vmem:[%s269 + $0x740] sm:$0xff]
        %v699 = vld [vmem:[%s269 + $0x748] sm:$0xff]
        %v700 = vld [vmem:[%s269 + $0x750] sm:$0xff]
        %v701 = vld [vmem:[%s269 + $0x758] sm:$0xff]
        %v702 = vld [vmem:[%s269 + $0x760] sm:$0xff]
        %v703 = vld [vmem:[%s269 + $0x768] sm:$0xff]
        %v704 = vld [vmem:[%s269 + $0x770] sm:$0xff]
        %v705 = vld [vmem:[%s269 + $0x778] sm:$0xff]
        %v706 = vld [vmem:[%s269 + $0x780] sm:$0xff]
        %v707 = vld [vmem:[%s269 + $0x788] sm:$0xff]
        %v708 = vld [vmem:[%s269 + $0x790] sm:$0xff]
        %v709 = vld [vmem:[%s269 + $0x798] sm:$0xff]
        %v710 = vld [vmem:[%s269 + $0x7a0] sm:$0xff]
        %v711 = vld [vmem:[%s269 + $0x7a8] sm:$0xff]
        %v712 = vld [vmem:[%s269 + $0x7b0] sm:$0xff]
        %v713 = vld [vmem:[%s269 + $0x7b8] sm:$0xff]
        %v714 = vld [vmem:[%s269 + $0x7c0] sm:$0xff]
        %v715 = vld [vmem:[%s269 + $0x7c8] sm:$0xff]
        %v716 = vld [vmem:[%s269 + $0x7d0] sm:$0xff]
        %v717 = vld [vmem:[%s269 + $0x7d8] sm:$0xff]
        %v718 = vld [vmem:[%s269 + $0x7e0] sm:$0xff]
        %v719 = vld [vmem:[%s269 + $0x7e8] sm:$0xff]
        %v720 = vld [vmem:[%s269 + $0x7f0] sm:$0xff]
        %v721 = vld [vmem:[%s269 + $0x7f8] sm:$0xff]
        %v722 = vunpack.c.l.bf16 %v466
        %v723 = vunpack.c.h.bf16 %v466
        %v724 = vunpack.c.l.bf16 %v467
        %v725 = vunpack.c.h.bf16 %v467
        %v726 = vunpack.c.l.bf16 %v468
        %v727 = vunpack.c.h.bf16 %v468
        %v728 = vunpack.c.l.bf16 %v469
        %v729 = vunpack.c.h.bf16 %v469
        %v730 = vunpack.c.l.bf16 %v470
        %v731 = vunpack.c.h.bf16 %v470
        %v732 = vunpack.c.l.bf16 %v471
        %v733 = vunpack.c.h.bf16 %v471
        %v734 = vunpack.c.l.bf16 %v472
        %v735 = vunpack.c.h.bf16 %v472
        %v736 = vunpack.c.l.bf16 %v473
        %v737 = vunpack.c.h.bf16 %v473
        %v738 = vunpack.c.l.bf16 %v474
        %v739 = vunpack.c.h.bf16 %v474
        %v740 = vunpack.c.l.bf16 %v475
        %v741 = vunpack.c.h.bf16 %v475
        %v742 = vunpack.c.l.bf16 %v476
        %v743 = vunpack.c.h.bf16 %v476
        %v744 = vunpack.c.l.bf16 %v477
        %v745 = vunpack.c.h.bf16 %v477
        %v746 = vunpack.c.l.bf16 %v478
        %v747 = vunpack.c.h.bf16 %v478
        %v748 = vunpack.c.l.bf16 %v479
        %v749 = vunpack.c.h.bf16 %v479
        %v750 = vunpack.c.l.bf16 %v480
        %v751 = vunpack.c.h.bf16 %v480
        %v752 = vunpack.c.l.bf16 %v481
        %v753 = vunpack.c.h.bf16 %v481
        %v754 = vunpack.c.l.bf16 %v482
        %v755 = vunpack.c.h.bf16 %v482
        %v756 = vunpack.c.l.bf16 %v483
        %v757 = vunpack.c.h.bf16 %v483
        %v758 = vunpack.c.l.bf16 %v484
        %v759 = vunpack.c.h.bf16 %v484
        %v760 = vunpack.c.l.bf16 %v485
        %v761 = vunpack.c.h.bf16 %v485
        %v762 = vunpack.c.l.bf16 %v486
        %v763 = vunpack.c.h.bf16 %v486
        %v764 = vunpack.c.l.bf16 %v487
        %v765 = vunpack.c.h.bf16 %v487
        %v766 = vunpack.c.l.bf16 %v488
        %v767 = vunpack.c.h.bf16 %v488
        %v768 = vunpack.c.l.bf16 %v489
        %v769 = vunpack.c.h.bf16 %v489
        %v770 = vunpack.c.l.bf16 %v490
        %v771 = vunpack.c.h.bf16 %v490
        %v772 = vunpack.c.l.bf16 %v491
        %v773 = vunpack.c.h.bf16 %v491
        %v774 = vunpack.c.l.bf16 %v492
        %v775 = vunpack.c.h.bf16 %v492
        %v776 = vunpack.c.l.bf16 %v493
        %v777 = vunpack.c.h.bf16 %v493
        %v778 = vunpack.c.l.bf16 %v494
        %v779 = vunpack.c.h.bf16 %v494
        %v780 = vunpack.c.l.bf16 %v495
        %v781 = vunpack.c.h.bf16 %v495
        %v782 = vunpack.c.l.bf16 %v496
        %v783 = vunpack.c.h.bf16 %v496
        %v784 = vunpack.c.l.bf16 %v497
        %v785 = vunpack.c.h.bf16 %v497
        %v786 = vunpack.c.l.bf16 %v498
        %v787 = vunpack.c.h.bf16 %v498
        %v788 = vunpack.c.l.bf16 %v499
        %v789 = vunpack.c.h.bf16 %v499
        %v790 = vunpack.c.l.bf16 %v500
        %v791 = vunpack.c.h.bf16 %v500
        %v792 = vunpack.c.l.bf16 %v501
        %v793 = vunpack.c.h.bf16 %v501
        %v794 = vunpack.c.l.bf16 %v502
        %v795 = vunpack.c.h.bf16 %v502
        %v796 = vunpack.c.l.bf16 %v503
        %v797 = vunpack.c.h.bf16 %v503
        %v798 = vunpack.c.l.bf16 %v504
        %v799 = vunpack.c.h.bf16 %v504
        %v800 = vunpack.c.l.bf16 %v505
        %v801 = vunpack.c.h.bf16 %v505
        %v802 = vunpack.c.l.bf16 %v506
        %v803 = vunpack.c.h.bf16 %v506
        %v804 = vunpack.c.l.bf16 %v507
        %v805 = vunpack.c.h.bf16 %v507
        %v806 = vunpack.c.l.bf16 %v508
        %v807 = vunpack.c.h.bf16 %v508
        %v808 = vunpack.c.l.bf16 %v509
        %v809 = vunpack.c.h.bf16 %v509
        %v810 = vunpack.c.l.bf16 %v510
        %v811 = vunpack.c.h.bf16 %v510
        %v812 = vunpack.c.l.bf16 %v511
        %v813 = vunpack.c.h.bf16 %v511
        %v814 = vunpack.c.l.bf16 %v512
        %v815 = vunpack.c.h.bf16 %v512
        %v816 = vunpack.c.l.bf16 %v513
        %v817 = vunpack.c.h.bf16 %v513
        %v818 = vunpack.c.l.bf16 %v514
        %v819 = vunpack.c.h.bf16 %v514
        %v820 = vunpack.c.l.bf16 %v515
        %v821 = vunpack.c.h.bf16 %v515
        %v822 = vunpack.c.l.bf16 %v516
        %v823 = vunpack.c.h.bf16 %v516
        %v824 = vunpack.c.l.bf16 %v517
        %v825 = vunpack.c.h.bf16 %v517
        %v826 = vunpack.c.l.bf16 %v518
        %v827 = vunpack.c.h.bf16 %v518
        %v828 = vunpack.c.l.bf16 %v519
        %v829 = vunpack.c.h.bf16 %v519
        %v830 = vunpack.c.l.bf16 %v520
        %v831 = vunpack.c.h.bf16 %v520
        %v832 = vunpack.c.l.bf16 %v521
        %v833 = vunpack.c.h.bf16 %v521
        %v834 = vunpack.c.l.bf16 %v522
        %v835 = vunpack.c.h.bf16 %v522
        %v836 = vunpack.c.l.bf16 %v523
        %v837 = vunpack.c.h.bf16 %v523
        %v838 = vunpack.c.l.bf16 %v524
        %v839 = vunpack.c.h.bf16 %v524
        %v840 = vunpack.c.l.bf16 %v525
        %v841 = vunpack.c.h.bf16 %v525
        %v842 = vunpack.c.l.bf16 %v526
        %v843 = vunpack.c.h.bf16 %v526
        %v844 = vunpack.c.l.bf16 %v527
        %v845 = vunpack.c.h.bf16 %v527
        %v846 = vunpack.c.l.bf16 %v528
        %v847 = vunpack.c.h.bf16 %v528
        %v848 = vunpack.c.l.bf16 %v529
        %v849 = vunpack.c.h.bf16 %v529
        %v850 = vunpack.c.l.bf16 %v530
        %v851 = vunpack.c.h.bf16 %v530
        %v852 = vunpack.c.l.bf16 %v531
        %v853 = vunpack.c.h.bf16 %v531
        %v854 = vunpack.c.l.bf16 %v532
        %v855 = vunpack.c.h.bf16 %v532
        %v856 = vunpack.c.l.bf16 %v533
        %v857 = vunpack.c.h.bf16 %v533
        %v858 = vunpack.c.l.bf16 %v534
        %v859 = vunpack.c.h.bf16 %v534
        %v860 = vunpack.c.l.bf16 %v535
        %v861 = vunpack.c.h.bf16 %v535
        %v862 = vunpack.c.l.bf16 %v536
        %v863 = vunpack.c.h.bf16 %v536
        %v864 = vunpack.c.l.bf16 %v537
        %v865 = vunpack.c.h.bf16 %v537
        %v866 = vunpack.c.l.bf16 %v538
        %v867 = vunpack.c.h.bf16 %v538
        %v868 = vunpack.c.l.bf16 %v539
        %v869 = vunpack.c.h.bf16 %v539
        %v870 = vunpack.c.l.bf16 %v540
        %v871 = vunpack.c.h.bf16 %v540
        %v872 = vunpack.c.l.bf16 %v541
        %v873 = vunpack.c.h.bf16 %v541
        %v874 = vunpack.c.l.bf16 %v542
        %v875 = vunpack.c.h.bf16 %v542
        %v876 = vunpack.c.l.bf16 %v543
        %v877 = vunpack.c.h.bf16 %v543
        %v878 = vunpack.c.l.bf16 %v544
        %v879 = vunpack.c.h.bf16 %v544
        %v880 = vunpack.c.l.bf16 %v545
        %v881 = vunpack.c.h.bf16 %v545
        %v882 = vunpack.c.l.bf16 %v546
        %v883 = vunpack.c.h.bf16 %v546
        %v884 = vunpack.c.l.bf16 %v547
        %v885 = vunpack.c.h.bf16 %v547
        %v886 = vunpack.c.l.bf16 %v548
        %v887 = vunpack.c.h.bf16 %v548
        %v888 = vunpack.c.l.bf16 %v549
        %v889 = vunpack.c.h.bf16 %v549
        %v890 = vunpack.c.l.bf16 %v550
        %v891 = vunpack.c.h.bf16 %v550
        %v892 = vunpack.c.l.bf16 %v551
        %v893 = vunpack.c.h.bf16 %v551
        %v894 = vunpack.c.l.bf16 %v552
        %v895 = vunpack.c.h.bf16 %v552
        %v896 = vunpack.c.l.bf16 %v553
        %v897 = vunpack.c.h.bf16 %v553
        %v898 = vunpack.c.l.bf16 %v554
        %v899 = vunpack.c.h.bf16 %v554
        %v900 = vunpack.c.l.bf16 %v555
        %v901 = vunpack.c.h.bf16 %v555
        %v902 = vunpack.c.l.bf16 %v556
        %v903 = vunpack.c.h.bf16 %v556
        %v904 = vunpack.c.l.bf16 %v557
        %v905 = vunpack.c.h.bf16 %v557
        %v906 = vunpack.c.l.bf16 %v558
        %v907 = vunpack.c.h.bf16 %v558
        %v908 = vunpack.c.l.bf16 %v559
        %v909 = vunpack.c.h.bf16 %v559
        %v910 = vunpack.c.l.bf16 %v560
        %v911 = vunpack.c.h.bf16 %v560
        %v912 = vunpack.c.l.bf16 %v561
        %v913 = vunpack.c.h.bf16 %v561
        %v914 = vunpack.c.l.bf16 %v562
        %v915 = vunpack.c.h.bf16 %v562
        %v916 = vunpack.c.l.bf16 %v563
        %v917 = vunpack.c.h.bf16 %v563
        %v918 = vunpack.c.l.bf16 %v564
        %v919 = vunpack.c.h.bf16 %v564
        %v920 = vunpack.c.l.bf16 %v565
        %v921 = vunpack.c.h.bf16 %v565
        %v922 = vunpack.c.l.bf16 %v566
        %v923 = vunpack.c.h.bf16 %v566
        %v924 = vunpack.c.l.bf16 %v567
        %v925 = vunpack.c.h.bf16 %v567
        %v926 = vunpack.c.l.bf16 %v568
        %v927 = vunpack.c.h.bf16 %v568
        %v928 = vunpack.c.l.bf16 %v569
        %v929 = vunpack.c.h.bf16 %v569
        %v930 = vunpack.c.l.bf16 %v570
        %v931 = vunpack.c.h.bf16 %v570
        %v932 = vunpack.c.l.bf16 %v571
        %v933 = vunpack.c.h.bf16 %v571
        %v934 = vunpack.c.l.bf16 %v572
        %v935 = vunpack.c.h.bf16 %v572
        %v936 = vunpack.c.l.bf16 %v573
        %v937 = vunpack.c.h.bf16 %v573
        %v938 = vunpack.c.l.bf16 %v574
        %v939 = vunpack.c.h.bf16 %v574
        %v940 = vunpack.c.l.bf16 %v575
        %v941 = vunpack.c.h.bf16 %v575
        %v942 = vunpack.c.l.bf16 %v576
        %v943 = vunpack.c.h.bf16 %v576
        %v944 = vunpack.c.l.bf16 %v577
        %v945 = vunpack.c.h.bf16 %v577
        %v946 = vunpack.c.l.bf16 %v578
        %v947 = vunpack.c.h.bf16 %v578
        %v948 = vunpack.c.l.bf16 %v579
        %v949 = vunpack.c.h.bf16 %v579
        %v950 = vunpack.c.l.bf16 %v580
        %v951 = vunpack.c.h.bf16 %v580
        %v952 = vunpack.c.l.bf16 %v581
        %v953 = vunpack.c.h.bf16 %v581
        %v954 = vunpack.c.l.bf16 %v582
        %v955 = vunpack.c.h.bf16 %v582
        %v956 = vunpack.c.l.bf16 %v583
        %v957 = vunpack.c.h.bf16 %v583
        %v958 = vunpack.c.l.bf16 %v584
        %v959 = vunpack.c.h.bf16 %v584
        %v960 = vunpack.c.l.bf16 %v585
        %v961 = vunpack.c.h.bf16 %v585
        %v962 = vunpack.c.l.bf16 %v586
        %v963 = vunpack.c.h.bf16 %v586
        %v964 = vunpack.c.l.bf16 %v587
        %v965 = vunpack.c.h.bf16 %v587
        %v966 = vunpack.c.l.bf16 %v588
        %v967 = vunpack.c.h.bf16 %v588
        %v968 = vunpack.c.l.bf16 %v589
        %v969 = vunpack.c.h.bf16 %v589
        %v970 = vunpack.c.l.bf16 %v590
        %v971 = vunpack.c.h.bf16 %v590
        %v972 = vunpack.c.l.bf16 %v591
        %v973 = vunpack.c.h.bf16 %v591
        %v974 = vunpack.c.l.bf16 %v592
        %v975 = vunpack.c.h.bf16 %v592
        %v976 = vunpack.c.l.bf16 %v593
        %v977 = vunpack.c.h.bf16 %v593
        %v978 = vunpack.c.l.bf16 %v594
        %v979 = vunpack.c.h.bf16 %v594
        %v980 = vunpack.c.l.bf16 %v595
        %v981 = vunpack.c.h.bf16 %v595
        %v982 = vunpack.c.l.bf16 %v596
        %v983 = vunpack.c.h.bf16 %v596
        %v984 = vunpack.c.l.bf16 %v597
        %v985 = vunpack.c.h.bf16 %v597
        %v986 = vunpack.c.l.bf16 %v598
        %v987 = vunpack.c.h.bf16 %v598
        %v988 = vunpack.c.l.bf16 %v599
        %v989 = vunpack.c.h.bf16 %v599
        %v990 = vunpack.c.l.bf16 %v600
        %v991 = vunpack.c.h.bf16 %v600
        %v992 = vunpack.c.l.bf16 %v601
        %v993 = vunpack.c.h.bf16 %v601
        %v994 = vunpack.c.l.bf16 %v602
        %v995 = vunpack.c.h.bf16 %v602
        %v996 = vunpack.c.l.bf16 %v603
        %v997 = vunpack.c.h.bf16 %v603
        %v998 = vunpack.c.l.bf16 %v604
        %v999 = vunpack.c.h.bf16 %v604
        %v1000 = vunpack.c.l.bf16 %v605
        %v1001 = vunpack.c.h.bf16 %v605
        %v1002 = vunpack.c.l.bf16 %v606
        %v1003 = vunpack.c.h.bf16 %v606
        %v1004 = vunpack.c.l.bf16 %v607
        %v1005 = vunpack.c.h.bf16 %v607
        %v1006 = vunpack.c.l.bf16 %v608
        %v1007 = vunpack.c.h.bf16 %v608
        %v1008 = vunpack.c.l.bf16 %v609
        %v1009 = vunpack.c.h.bf16 %v609
        %v1010 = vunpack.c.l.bf16 %v610
        %v1011 = vunpack.c.h.bf16 %v610
        %v1012 = vunpack.c.l.bf16 %v611
        %v1013 = vunpack.c.h.bf16 %v611
        %v1014 = vunpack.c.l.bf16 %v612
        %v1015 = vunpack.c.h.bf16 %v612
        %v1016 = vunpack.c.l.bf16 %v613
        %v1017 = vunpack.c.h.bf16 %v613
        %v1018 = vunpack.c.l.bf16 %v614
        %v1019 = vunpack.c.h.bf16 %v614
        %v1020 = vunpack.c.l.bf16 %v615
        %v1021 = vunpack.c.h.bf16 %v615
        %v1022 = vunpack.c.l.bf16 %v616
        %v1023 = vunpack.c.h.bf16 %v616
        %v1024 = vunpack.c.l.bf16 %v617
        %v1025 = vunpack.c.h.bf16 %v617
        %v1026 = vunpack.c.l.bf16 %v618
        %v1027 = vunpack.c.h.bf16 %v618
        %v1028 = vunpack.c.l.bf16 %v619
        %v1029 = vunpack.c.h.bf16 %v619
        %v1030 = vunpack.c.l.bf16 %v620
        %v1031 = vunpack.c.h.bf16 %v620
        %v1032 = vunpack.c.l.bf16 %v621
        %v1033 = vunpack.c.h.bf16 %v621
        %v1034 = vunpack.c.l.bf16 %v622
        %v1035 = vunpack.c.h.bf16 %v622
        %v1036 = vunpack.c.l.bf16 %v623
        %v1037 = vunpack.c.h.bf16 %v623
        %v1038 = vunpack.c.l.bf16 %v624
        %v1039 = vunpack.c.h.bf16 %v624
        %v1040 = vunpack.c.l.bf16 %v625
        %v1041 = vunpack.c.h.bf16 %v625
        %v1042 = vunpack.c.l.bf16 %v626
        %v1043 = vunpack.c.h.bf16 %v626
        %v1044 = vunpack.c.l.bf16 %v627
        %v1045 = vunpack.c.h.bf16 %v627
        %v1046 = vunpack.c.l.bf16 %v628
        %v1047 = vunpack.c.h.bf16 %v628
        %v1048 = vunpack.c.l.bf16 %v629
        %v1049 = vunpack.c.h.bf16 %v629
        %v1050 = vunpack.c.l.bf16 %v630
        %v1051 = vunpack.c.h.bf16 %v630
        %v1052 = vunpack.c.l.bf16 %v631
        %v1053 = vunpack.c.h.bf16 %v631
        %v1054 = vunpack.c.l.bf16 %v632
        %v1055 = vunpack.c.h.bf16 %v632
        %v1056 = vunpack.c.l.bf16 %v633
        %v1057 = vunpack.c.h.bf16 %v633
        %v1058 = vunpack.c.l.bf16 %v634
        %v1059 = vunpack.c.h.bf16 %v634
        %v1060 = vunpack.c.l.bf16 %v635
        %v1061 = vunpack.c.h.bf16 %v635
        %v1062 = vunpack.c.l.bf16 %v636
        %v1063 = vunpack.c.h.bf16 %v636
        %v1064 = vunpack.c.l.bf16 %v637
        %v1065 = vunpack.c.h.bf16 %v637
        %v1066 = vunpack.c.l.bf16 %v638
        %v1067 = vunpack.c.h.bf16 %v638
        %v1068 = vunpack.c.l.bf16 %v639
        %v1069 = vunpack.c.h.bf16 %v639
        %v1070 = vunpack.c.l.bf16 %v640
        %v1071 = vunpack.c.h.bf16 %v640
        %v1072 = vunpack.c.l.bf16 %v641
        %v1073 = vunpack.c.h.bf16 %v641
        %v1074 = vunpack.c.l.bf16 %v642
        %v1075 = vunpack.c.h.bf16 %v642
        %v1076 = vunpack.c.l.bf16 %v643
        %v1077 = vunpack.c.h.bf16 %v643
        %v1078 = vunpack.c.l.bf16 %v644
        %v1079 = vunpack.c.h.bf16 %v644
        %v1080 = vunpack.c.l.bf16 %v645
        %v1081 = vunpack.c.h.bf16 %v645
        %v1082 = vunpack.c.l.bf16 %v646
        %v1083 = vunpack.c.h.bf16 %v646
        %v1084 = vunpack.c.l.bf16 %v647
        %v1085 = vunpack.c.h.bf16 %v647
        %v1086 = vunpack.c.l.bf16 %v648
        %v1087 = vunpack.c.h.bf16 %v648
        %v1088 = vunpack.c.l.bf16 %v649
        %v1089 = vunpack.c.h.bf16 %v649
        %v1090 = vunpack.c.l.bf16 %v650
        %v1091 = vunpack.c.h.bf16 %v650
        %v1092 = vunpack.c.l.bf16 %v651
        %v1093 = vunpack.c.h.bf16 %v651
        %v1094 = vunpack.c.l.bf16 %v652
        %v1095 = vunpack.c.h.bf16 %v652
        %v1096 = vunpack.c.l.bf16 %v653
        %v1097 = vunpack.c.h.bf16 %v653
        %v1098 = vunpack.c.l.bf16 %v654
        %v1099 = vunpack.c.h.bf16 %v654
        %v1100 = vunpack.c.l.bf16 %v655
        %v1101 = vunpack.c.h.bf16 %v655
        %v1102 = vunpack.c.l.bf16 %v656
        %v1103 = vunpack.c.h.bf16 %v656
        %v1104 = vunpack.c.l.bf16 %v657
        %v1105 = vunpack.c.h.bf16 %v657
        %v1106 = vunpack.c.l.bf16 %v658
        %v1107 = vunpack.c.h.bf16 %v658
        %v1108 = vunpack.c.l.bf16 %v659
        %v1109 = vunpack.c.h.bf16 %v659
        %v1110 = vunpack.c.l.bf16 %v660
        %v1111 = vunpack.c.h.bf16 %v660
        %v1112 = vunpack.c.l.bf16 %v661
        %v1113 = vunpack.c.h.bf16 %v661
        %v1114 = vunpack.c.l.bf16 %v662
        %v1115 = vunpack.c.h.bf16 %v662
        %v1116 = vunpack.c.l.bf16 %v663
        %v1117 = vunpack.c.h.bf16 %v663
        %v1118 = vunpack.c.l.bf16 %v664
        %v1119 = vunpack.c.h.bf16 %v664
        %v1120 = vunpack.c.l.bf16 %v665
        %v1121 = vunpack.c.h.bf16 %v665
        %v1122 = vunpack.c.l.bf16 %v666
        %v1123 = vunpack.c.h.bf16 %v666
        %v1124 = vunpack.c.l.bf16 %v667
        %v1125 = vunpack.c.h.bf16 %v667
        %v1126 = vunpack.c.l.bf16 %v668
        %v1127 = vunpack.c.h.bf16 %v668
        %v1128 = vunpack.c.l.bf16 %v669
        %v1129 = vunpack.c.h.bf16 %v669
        %v1130 = vunpack.c.l.bf16 %v670
        %v1131 = vunpack.c.h.bf16 %v670
        %v1132 = vunpack.c.l.bf16 %v671
        %v1133 = vunpack.c.h.bf16 %v671
        %v1134 = vunpack.c.l.bf16 %v672
        %v1135 = vunpack.c.h.bf16 %v672
        %v1136 = vunpack.c.l.bf16 %v673
        %v1137 = vunpack.c.h.bf16 %v673
        %v1138 = vunpack.c.l.bf16 %v674
        %v1139 = vunpack.c.h.bf16 %v674
        %v1140 = vunpack.c.l.bf16 %v675
        %v1141 = vunpack.c.h.bf16 %v675
        %v1142 = vunpack.c.l.bf16 %v676
        %v1143 = vunpack.c.h.bf16 %v676
        %v1144 = vunpack.c.l.bf16 %v677
        %v1145 = vunpack.c.h.bf16 %v677
        %v1146 = vunpack.c.l.bf16 %v678
        %v1147 = vunpack.c.h.bf16 %v678
        %v1148 = vunpack.c.l.bf16 %v679
        %v1149 = vunpack.c.h.bf16 %v679
        %v1150 = vunpack.c.l.bf16 %v680
        %v1151 = vunpack.c.h.bf16 %v680
        %v1152 = vunpack.c.l.bf16 %v681
        %v1153 = vunpack.c.h.bf16 %v681
        %v1154 = vunpack.c.l.bf16 %v682
        %v1155 = vunpack.c.h.bf16 %v682
        %v1156 = vunpack.c.l.bf16 %v683
        %v1157 = vunpack.c.h.bf16 %v683
        %v1158 = vunpack.c.l.bf16 %v684
        %v1159 = vunpack.c.h.bf16 %v684
        %v1160 = vunpack.c.l.bf16 %v685
        %v1161 = vunpack.c.h.bf16 %v685
        %v1162 = vunpack.c.l.bf16 %v686
        %v1163 = vunpack.c.h.bf16 %v686
        %v1164 = vunpack.c.l.bf16 %v687
        %v1165 = vunpack.c.h.bf16 %v687
        %v1166 = vunpack.c.l.bf16 %v688
        %v1167 = vunpack.c.h.bf16 %v688
        %v1168 = vunpack.c.l.bf16 %v689
        %v1169 = vunpack.c.h.bf16 %v689
        %v1170 = vunpack.c.l.bf16 %v690
        %v1171 = vunpack.c.h.bf16 %v690
        %v1172 = vunpack.c.l.bf16 %v691
        %v1173 = vunpack.c.h.bf16 %v691
        %v1174 = vunpack.c.l.bf16 %v692
        %v1175 = vunpack.c.h.bf16 %v692
        %v1176 = vunpack.c.l.bf16 %v693
        %v1177 = vunpack.c.h.bf16 %v693
        %v1178 = vunpack.c.l.bf16 %v694
        %v1179 = vunpack.c.h.bf16 %v694
        %v1180 = vunpack.c.l.bf16 %v695
        %v1181 = vunpack.c.h.bf16 %v695
        %v1182 = vunpack.c.l.bf16 %v696
        %v1183 = vunpack.c.h.bf16 %v696
        %v1184 = vunpack.c.l.bf16 %v697
        %v1185 = vunpack.c.h.bf16 %v697
        %v1186 = vunpack.c.l.bf16 %v698
        %v1187 = vunpack.c.h.bf16 %v698
        %v1188 = vunpack.c.l.bf16 %v699
        %v1189 = vunpack.c.h.bf16 %v699
        %v1190 = vunpack.c.l.bf16 %v700
        %v1191 = vunpack.c.h.bf16 %v700
        %v1192 = vunpack.c.l.bf16 %v701
        %v1193 = vunpack.c.h.bf16 %v701
        %v1194 = vunpack.c.l.bf16 %v702
        %v1195 = vunpack.c.h.bf16 %v702
        %v1196 = vunpack.c.l.bf16 %v703
        %v1197 = vunpack.c.h.bf16 %v703
        %v1198 = vunpack.c.l.bf16 %v704
        %v1199 = vunpack.c.h.bf16 %v704
        %v1200 = vunpack.c.l.bf16 %v705
        %v1201 = vunpack.c.h.bf16 %v705
        %v1202 = vunpack.c.l.bf16 %v706
        %v1203 = vunpack.c.h.bf16 %v706
        %v1204 = vunpack.c.l.bf16 %v707
        %v1205 = vunpack.c.h.bf16 %v707
        %v1206 = vunpack.c.l.bf16 %v708
        %v1207 = vunpack.c.h.bf16 %v708
        %v1208 = vunpack.c.l.bf16 %v709
        %v1209 = vunpack.c.h.bf16 %v709
        %v1210 = vunpack.c.l.bf16 %v710
        %v1211 = vunpack.c.h.bf16 %v710
        %v1212 = vunpack.c.l.bf16 %v711
        %v1213 = vunpack.c.h.bf16 %v711
        %v1214 = vunpack.c.l.bf16 %v712
        %v1215 = vunpack.c.h.bf16 %v712
        %v1216 = vunpack.c.l.bf16 %v713
        %v1217 = vunpack.c.h.bf16 %v713
        %v1218 = vunpack.c.l.bf16 %v714
        %v1219 = vunpack.c.h.bf16 %v714
        %v1220 = vunpack.c.l.bf16 %v715
        %v1221 = vunpack.c.h.bf16 %v715
        %v1222 = vunpack.c.l.bf16 %v716
        %v1223 = vunpack.c.h.bf16 %v716
        %v1224 = vunpack.c.l.bf16 %v717
        %v1225 = vunpack.c.h.bf16 %v717
        %v1226 = vunpack.c.l.bf16 %v718
        %v1227 = vunpack.c.h.bf16 %v718
        %v1228 = vunpack.c.l.bf16 %v719
        %v1229 = vunpack.c.h.bf16 %v719
        %v1230 = vunpack.c.l.bf16 %v720
        %v1231 = vunpack.c.h.bf16 %v720
        %v1232 = vunpack.c.l.bf16 %v721
        %v1233 = vunpack.c.h.bf16 %v721
        %v1234 = vld [vmem:[#allocation2] sm:$0xff]
        %v1235 = vld [vmem:[#allocation2 + $0x8] sm:$0xff]
        %v1236 = vld [vmem:[#allocation2 + $0x10] sm:$0xff]
        %v1237 = vld [vmem:[#allocation2 + $0x18] sm:$0xff]
        %1238 = vmatprep.subr.mxu0 %v723
        %1239 = vmatpush1.msra.mxu0 %v722
        %1240 = vmatprep.subr.mxu0 %v727
        %1241 = vmatpush1.msra.mxu0 %v726
        %1242 = vmatprep.subr.mxu0 %v731
        %1243 = vmatpush1.msra.mxu0 %v730
        %1244 = vmatprep.subr.mxu0 %v735
        %1245 = vmatpush1.msra.mxu0 %v734
        %1246 = vmatprep.subr.mxu0 %v739
        %1247 = vmatpush1.msra.mxu0 %v738
        %1248 = vmatprep.subr.mxu0 %v743
        %1249 = vmatpush1.msra.mxu0 %v742
        %1250 = vmatprep.subr.mxu0 %v747
        %1251 = vmatpush1.msra.mxu0 %v746
        %1252 = vmatprep.subr.mxu0 %v751
        %1253 = vmatpush1.msra.mxu0 %v750
        %1254 = vmatprep.subr.mxu0 %v755
        %1255 = vmatpush1.msra.mxu0 %v754
        %1256 = vmatprep.subr.mxu0 %v759
        %1257 = vmatpush1.msra.mxu0 %v758
        %1258 = vmatprep.subr.mxu0 %v763
        %1259 = vmatpush1.msra.mxu0 %v762
        %1260 = vmatprep.subr.mxu0 %v767
        %1261 = vmatpush1.msra.mxu0 %v766
        %1262 = vmatprep.subr.mxu0 %v771
        %1263 = vmatpush1.msra.mxu0 %v770
        %1264 = vmatprep.subr.mxu0 %v775
        %1265 = vmatpush1.msra.mxu0 %v774
        %1266 = vmatprep.subr.mxu0 %v779
        %1267 = vmatpush1.msra.mxu0 %v778
        %1268 = vmatprep.subr.mxu0 %v783
        %1269 = vmatpush1.msra.mxu0 %v782
        %1270 = vmatprep.subr.mxu0 %v787
        %1271 = vmatpush1.msra.mxu0 %v786
        %1272 = vmatprep.subr.mxu0 %v791
        %1273 = vmatpush1.msra.mxu0 %v790
        %1274 = vmatprep.subr.mxu0 %v795
        %1275 = vmatpush1.msra.mxu0 %v794
        %1276 = vmatprep.subr.mxu0 %v799
        %1277 = vmatpush1.msra.mxu0 %v798
        %1278 = vmatprep.subr.mxu0 %v803
        %1279 = vmatpush1.msra.mxu0 %v802
        %1280 = vmatprep.subr.mxu0 %v807
        %1281 = vmatpush1.msra.mxu0 %v806
        %1282 = vmatprep.subr.mxu0 %v811
        %1283 = vmatpush1.msra.mxu0 %v810
        %1284 = vmatprep.subr.mxu0 %v815
        %1285 = vmatpush1.msra.mxu0 %v814
        %1286 = vmatprep.subr.mxu0 %v819
        %1287 = vmatpush1.msra.mxu0 %v818
        %1288 = vmatprep.subr.mxu0 %v823
        %1289 = vmatpush1.msra.mxu0 %v822
        %1290 = vmatprep.subr.mxu0 %v827
        %1291 = vmatpush1.msra.mxu0 %v826
        %1292 = vmatprep.subr.mxu0 %v831
        %1293 = vmatpush1.msra.mxu0 %v830
        %1294 = vmatprep.subr.mxu0 %v835
        %1295 = vmatpush1.msra.mxu0 %v834
        %1296 = vmatprep.subr.mxu0 %v839
        %1297 = vmatpush1.msra.mxu0 %v838
        %1298 = vmatprep.subr.mxu0 %v843
        %1299 = vmatpush1.msra.mxu0 %v842
        %1300 = vmatprep.subr.mxu0 %v847
        %1301 = vmatpush1.msra.mxu0 %v846
        %1302 = vmatprep.mubr.f32.mxu0 %v459
        %1303 = vmatmul.mubr.f32.gmra.mrb[0].mxu0 %v458
        %v1304 = vpop.f32.mrb[0].mxu0
        %v1305 = vadd.f32 0.0, %v1304
        %v1306 = vpop.f32.mrb[0].mxu0
        %v1307 = vadd.f32 0.0, %v1306
        %1308 = vdwg.mxu0
        %1309 = vmatprep.subr.mxu0 %v851
        %1310 = vmatpush1.msra.mxu0 %v850
        %1311 = vmatprep.subr.mxu0 %v855
        %1312 = vmatpush1.msra.mxu0 %v854
        %1313 = vmatprep.subr.mxu0 %v859
        %1314 = vmatpush1.msra.mxu0 %v858
        %1315 = vmatprep.subr.mxu0 %v863
        %1316 = vmatpush1.msra.mxu0 %v862
        %1317 = vmatprep.subr.mxu0 %v867
        %1318 = vmatpush1.msra.mxu0 %v866
        %1319 = vmatprep.subr.mxu0 %v871
        %1320 = vmatpush1.msra.mxu0 %v870
        %1321 = vmatprep.subr.mxu0 %v875
        %1322 = vmatpush1.msra.mxu0 %v874
        %1323 = vmatprep.subr.mxu0 %v879
        %1324 = vmatpush1.msra.mxu0 %v878
        %1325 = vmatprep.subr.mxu0 %v883
        %1326 = vmatpush1.msra.mxu0 %v882
        %1327 = vmatprep.subr.mxu0 %v887
        %1328 = vmatpush1.msra.mxu0 %v886
        %1329 = vmatprep.subr.mxu0 %v891
        %1330 = vmatpush1.msra.mxu0 %v890
        %1331 = vmatprep.subr.mxu0 %v895
        %1332 = vmatpush1.msra.mxu0 %v894
        %1333 = vmatprep.subr.mxu0 %v899
        %1334 = vmatpush1.msra.mxu0 %v898
        %1335 = vmatprep.subr.mxu0 %v903
        %1336 = vmatpush1.msra.mxu0 %v902
        %1337 = vmatprep.subr.mxu0 %v907
        %1338 = vmatpush1.msra.mxu0 %v906
        %1339 = vmatprep.subr.mxu0 %v911
        %1340 = vmatpush1.msra.mxu0 %v910
        %1341 = vmatprep.subr.mxu0 %v915
        %1342 = vmatpush1.msra.mxu0 %v914
        %1343 = vmatprep.subr.mxu0 %v919
        %1344 = vmatpush1.msra.mxu0 %v918
        %1345 = vmatprep.subr.mxu0 %v923
        %1346 = vmatpush1.msra.mxu0 %v922
        %1347 = vmatprep.subr.mxu0 %v927
        %1348 = vmatpush1.msra.mxu0 %v926
        %1349 = vmatprep.subr.mxu0 %v931
        %1350 = vmatpush1.msra.mxu0 %v930
        %1351 = vmatprep.subr.mxu0 %v935
        %1352 = vmatpush1.msra.mxu0 %v934
        %1353 = vmatprep.subr.mxu0 %v939
        %1354 = vmatpush1.msra.mxu0 %v938
        %1355 = vmatprep.subr.mxu0 %v943
        %1356 = vmatpush1.msra.mxu0 %v942
        %1357 = vmatprep.subr.mxu0 %v947
        %1358 = vmatpush1.msra.mxu0 %v946
        %1359 = vmatprep.subr.mxu0 %v951
        %1360 = vmatpush1.msra.mxu0 %v950
        %1361 = vmatprep.subr.mxu0 %v955
        %1362 = vmatpush1.msra.mxu0 %v954
        %1363 = vmatprep.subr.mxu0 %v959
        %1364 = vmatpush1.msra.mxu0 %v958
        %1365 = vmatprep.subr.mxu0 %v963
        %1366 = vmatpush1.msra.mxu0 %v962
        %1367 = vmatprep.subr.mxu0 %v967
        %1368 = vmatpush1.msra.mxu0 %v966
        %1369 = vmatprep.subr.mxu0 %v971
        %1370 = vmatpush1.msra.mxu0 %v970
        %1371 = vmatprep.subr.mxu0 %v975
        %1372 = vmatpush1.msra.mxu0 %v974
        %1373 = vmatprep.mubr.f32.mxu0 %v461
        %1374 = vmatmul.mubr.f32.gmra.mrb[0].mxu0 %v460
        %v1375 = vpop.f32.mrb[0].mxu0
        %v1376 = vadd.f32 %v1305, %v1375
        %v1377 = vpop.f32.mrb[0].mxu0
        %v1378 = vadd.f32 %v1307, %v1377
        %1379 = vdwg.mxu0
        %1380 = vmatprep.subr.mxu0 %v979
        %1381 = vmatpush1.msra.mxu0 %v978
        %1382 = vmatprep.subr.mxu0 %v983
        %1383 = vmatpush1.msra.mxu0 %v982
        %1384 = vmatprep.subr.mxu0 %v987
        %1385 = vmatpush1.msra.mxu0 %v986
        %1386 = vmatprep.subr.mxu0 %v991
        %1387 = vmatpush1.msra.mxu0 %v990
        %1388 = vmatprep.subr.mxu0 %v995
        %1389 = vmatpush1.msra.mxu0 %v994
        %1390 = vmatprep.subr.mxu0 %v999
        %1391 = vmatpush1.msra.mxu0 %v998
        %1392 = vmatprep.subr.mxu0 %v1003
        %1393 = vmatpush1.msra.mxu0 %v1002
        %1394 = vmatprep.subr.mxu0 %v1007
        %1395 = vmatpush1.msra.mxu0 %v1006
        %1396 = vmatprep.subr.mxu0 %v1011
        %1397 = vmatpush1.msra.mxu0 %v1010
        %1398 = vmatprep.subr.mxu0 %v1015
        %1399 = vmatpush1.msra.mxu0 %v1014
        %1400 = vmatprep.subr.mxu0 %v1019
        %1401 = vmatpush1.msra.mxu0 %v1018
        %1402 = vmatprep.subr.mxu0 %v1023
        %1403 = vmatpush1.msra.mxu0 %v1022
        %1404 = vmatprep.subr.mxu0 %v1027
        %1405 = vmatpush1.msra.mxu0 %v1026
        %1406 = vmatprep.subr.mxu0 %v1031
        %1407 = vmatpush1.msra.mxu0 %v1030
        %1408 = vmatprep.subr.mxu0 %v1035
        %1409 = vmatpush1.msra.mxu0 %v1034
        %1410 = vmatprep.subr.mxu0 %v1039
        %1411 = vmatpush1.msra.mxu0 %v1038
        %1412 = vmatprep.subr.mxu0 %v1043
        %1413 = vmatpush1.msra.mxu0 %v1042
        %1414 = vmatprep.subr.mxu0 %v1047
        %1415 = vmatpush1.msra.mxu0 %v1046
        %1416 = vmatprep.subr.mxu0 %v1051
        %1417 = vmatpush1.msra.mxu0 %v1050
        %1418 = vmatprep.subr.mxu0 %v1055
        %1419 = vmatpush1.msra.mxu0 %v1054
        %1420 = vmatprep.subr.mxu0 %v1059
        %1421 = vmatpush1.msra.mxu0 %v1058
        %1422 = vmatprep.subr.mxu0 %v1063
        %1423 = vmatpush1.msra.mxu0 %v1062
        %1424 = vmatprep.subr.mxu0 %v1067
        %1425 = vmatpush1.msra.mxu0 %v1066
        %1426 = vmatprep.subr.mxu0 %v1071
        %1427 = vmatpush1.msra.mxu0 %v1070
        %1428 = vmatprep.subr.mxu0 %v1075
        %1429 = vmatpush1.msra.mxu0 %v1074
        %1430 = vmatprep.subr.mxu0 %v1079
        %1431 = vmatpush1.msra.mxu0 %v1078
        %1432 = vmatprep.subr.mxu0 %v1083
        %1433 = vmatpush1.msra.mxu0 %v1082
        %1434 = vmatprep.subr.mxu0 %v1087
        %1435 = vmatpush1.msra.mxu0 %v1086
        %1436 = vmatprep.subr.mxu0 %v1091
        %1437 = vmatpush1.msra.mxu0 %v1090
        %1438 = vmatprep.subr.mxu0 %v1095
        %1439 = vmatpush1.msra.mxu0 %v1094
        %1440 = vmatprep.subr.mxu0 %v1099
        %1441 = vmatpush1.msra.mxu0 %v1098
        %1442 = vmatprep.subr.mxu0 %v1103
        %1443 = vmatpush1.msra.mxu0 %v1102
        %1444 = vmatprep.mubr.f32.mxu0 %v463
        %1445 = vmatmul.mubr.f32.gmra.mrb[0].mxu0 %v462
        %v1446 = vpop.f32.mrb[0].mxu0
        %v1447 = vadd.f32 %v1376, %v1446
        %v1448 = vpop.f32.mrb[0].mxu0
        %v1449 = vadd.f32 %v1378, %v1448
        %1450 = vdwg.mxu0
        %1451 = vmatprep.subr.mxu0 %v1107
        %1452 = vmatpush1.msra.mxu0 %v1106
        %1453 = vmatprep.subr.mxu0 %v1111
        %1454 = vmatpush1.msra.mxu0 %v1110
        %1455 = vmatprep.subr.mxu0 %v1115
        %1456 = vmatpush1.msra.mxu0 %v1114
        %1457 = vmatprep.subr.mxu0 %v1119
        %1458 = vmatpush1.msra.mxu0 %v1118
        %1459 = vmatprep.subr.mxu0 %v1123
        %1460 = vmatpush1.msra.mxu0 %v1122
        %1461 = vmatprep.subr.mxu0 %v1127
        %1462 = vmatpush1.msra.mxu0 %v1126
        %1463 = vmatprep.subr.mxu0 %v1131
        %1464 = vmatpush1.msra.mxu0 %v1130
        %1465 = vmatprep.subr.mxu0 %v1135
        %1466 = vmatpush1.msra.mxu0 %v1134
        %1467 = vmatprep.subr.mxu0 %v1139
        %1468 = vmatpush1.msra.mxu0 %v1138
        %1469 = vmatprep.subr.mxu0 %v1143
        %1470 = vmatpush1.msra.mxu0 %v1142
        %1471 = vmatprep.subr.mxu0 %v1147
        %1472 = vmatpush1.msra.mxu0 %v1146
        %1473 = vmatprep.subr.mxu0 %v1151
        %1474 = vmatpush1.msra.mxu0 %v1150
        %1475 = vmatprep.subr.mxu0 %v1155
        %1476 = vmatpush1.msra.mxu0 %v1154
        %1477 = vmatprep.subr.mxu0 %v1159
        %1478 = vmatpush1.msra.mxu0 %v1158
        %1479 = vmatprep.subr.mxu0 %v1163
        %1480 = vmatpush1.msra.mxu0 %v1162
        %1481 = vmatprep.subr.mxu0 %v1167
        %1482 = vmatpush1.msra.mxu0 %v1166
        %1483 = vmatprep.subr.mxu0 %v1171
        %1484 = vmatpush1.msra.mxu0 %v1170
        %1485 = vmatprep.subr.mxu0 %v1175
        %1486 = vmatpush1.msra.mxu0 %v1174
        %1487 = vmatprep.subr.mxu0 %v1179
        %1488 = vmatpush1.msra.mxu0 %v1178
        %1489 = vmatprep.subr.mxu0 %v1183
        %1490 = vmatpush1.msra.mxu0 %v1182
        %1491 = vmatprep.subr.mxu0 %v1187
        %1492 = vmatpush1.msra.mxu0 %v1186
        %1493 = vmatprep.subr.mxu0 %v1191
        %1494 = vmatpush1.msra.mxu0 %v1190
        %1495 = vmatprep.subr.mxu0 %v1195
        %1496 = vmatpush1.msra.mxu0 %v1194
        %1497 = vmatprep.subr.mxu0 %v1199
        %1498 = vmatpush1.msra.mxu0 %v1198
        %1499 = vmatprep.subr.mxu0 %v1203
        %1500 = vmatpush1.msra.mxu0 %v1202
        %1501 = vmatprep.subr.mxu0 %v1207
        %1502 = vmatpush1.msra.mxu0 %v1206
        %1503 = vmatprep.subr.mxu0 %v1211
        %1504 = vmatpush1.msra.mxu0 %v1210
        %1505 = vmatprep.subr.mxu0 %v1215
        %1506 = vmatpush1.msra.mxu0 %v1214
        %1507 = vmatprep.subr.mxu0 %v1219
        %1508 = vmatpush1.msra.mxu0 %v1218
        %1509 = vmatprep.subr.mxu0 %v1223
        %1510 = vmatpush1.msra.mxu0 %v1222
        %1511 = vmatprep.subr.mxu0 %v1227
        %1512 = vmatpush1.msra.mxu0 %v1226
        %1513 = vmatprep.subr.mxu0 %v1231
        %1514 = vmatpush1.msra.mxu0 %v1230
        %1515 = vmatprep.mubr.f32.mxu0 %v465
        %1516 = vmatmul.mubr.f32.gmra.mrb[0].mxu0 %v464
        %v1517 = vpop.f32.mrb[0].mxu0
        %v1518 = vadd.f32 %v1447, %v1517
        %v1519 = vpop.f32.mrb[0].mxu0
        %v1520 = vadd.f32 %v1449, %v1519
        %1521 = vdwg.mxu0
        %1522 = vmatprep.subr.mxu0 %v725
        %1523 = vmatpush1.msra.mxu0 %v724
        %1524 = vmatprep.subr.mxu0 %v729
        %1525 = vmatpush1.msra.mxu0 %v728
        %1526 = vmatprep.subr.mxu0 %v733
        %1527 = vmatpush1.msra.mxu0 %v732
        %1528 = vmatprep.subr.mxu0 %v737
        %1529 = vmatpush1.msra.mxu0 %v736
        %1530 = vmatprep.subr.mxu0 %v741
        %1531 = vmatpush1.msra.mxu0 %v740
        %1532 = vmatprep.subr.mxu0 %v745
        %1533 = vmatpush1.msra.mxu0 %v744
        %1534 = vmatprep.subr.mxu0 %v749
        %1535 = vmatpush1.msra.mxu0 %v748
        %1536 = vmatprep.subr.mxu0 %v753
        %1537 = vmatpush1.msra.mxu0 %v752
        %1538 = vmatprep.subr.mxu0 %v757
        %1539 = vmatpush1.msra.mxu0 %v756
        %1540 = vmatprep.subr.mxu0 %v761
        %1541 = vmatpush1.msra.mxu0 %v760
        %1542 = vmatprep.subr.mxu0 %v765
        %1543 = vmatpush1.msra.mxu0 %v764
        %1544 = vmatprep.subr.mxu0 %v769
        %1545 = vmatpush1.msra.mxu0 %v768
        %1546 = vmatprep.subr.mxu0 %v773
        %1547 = vmatpush1.msra.mxu0 %v772
        %1548 = vmatprep.subr.mxu0 %v777
        %1549 = vmatpush1.msra.mxu0 %v776
        %1550 = vmatprep.subr.mxu0 %v781
        %1551 = vmatpush1.msra.mxu0 %v780
        %1552 = vmatprep.subr.mxu0 %v785
        %1553 = vmatpush1.msra.mxu0 %v784
        %1554 = vmatprep.subr.mxu0 %v789
        %1555 = vmatpush1.msra.mxu0 %v788
        %1556 = vmatprep.subr.mxu0 %v793
        %1557 = vmatpush1.msra.mxu0 %v792
        %1558 = vmatprep.subr.mxu0 %v797
        %1559 = vmatpush1.msra.mxu0 %v796
        %1560 = vmatprep.subr.mxu0 %v801
        %1561 = vmatpush1.msra.mxu0 %v800
        %1562 = vmatprep.subr.mxu0 %v805
        %1563 = vmatpush1.msra.mxu0 %v804
        %1564 = vmatprep.subr.mxu0 %v809
        %1565 = vmatpush1.msra.mxu0 %v808
        %1566 = vmatprep.subr.mxu0 %v813
        %1567 = vmatpush1.msra.mxu0 %v812
        %1568 = vmatprep.subr.mxu0 %v817
        %1569 = vmatpush1.msra.mxu0 %v816
        %1570 = vmatprep.subr.mxu0 %v821
        %1571 = vmatpush1.msra.mxu0 %v820
        %1572 = vmatprep.subr.mxu0 %v825
        %1573 = vmatpush1.msra.mxu0 %v824
        %1574 = vmatprep.subr.mxu0 %v829
        %1575 = vmatpush1.msra.mxu0 %v828
        %1576 = vmatprep.subr.mxu0 %v833
        %1577 = vmatpush1.msra.mxu0 %v832
        %1578 = vmatprep.subr.mxu0 %v837
        %1579 = vmatpush1.msra.mxu0 %v836
        %1580 = vmatprep.subr.mxu0 %v841
        %1581 = vmatpush1.msra.mxu0 %v840
        %1582 = vmatprep.subr.mxu0 %v845
        %1583 = vmatpush1.msra.mxu0 %v844
        %1584 = vmatprep.subr.mxu0 %v849
        %1585 = vmatpush1.msra.mxu0 %v848
        %1586 = vmatprep.mubr.f32.mxu0 %v459
        %1587 = vmatmul.mubr.f32.gmra.mrb[0].mxu0 %v458
        %v1588 = vpop.f32.mrb[0].mxu0
        %v1589 = vadd.f32 0.0, %v1588
        %v1590 = vpop.f32.mrb[0].mxu0
        %v1591 = vadd.f32 0.0, %v1590
        %1592 = vdwg.mxu0
        %1593 = vmatprep.subr.mxu0 %v853
        %1594 = vmatpush1.msra.mxu0 %v852
        %1595 = vmatprep.subr.mxu0 %v857
        %1596 = vmatpush1.msra.mxu0 %v856
        %1597 = vmatprep.subr.mxu0 %v861
        %1598 = vmatpush1.msra.mxu0 %v860
        %1599 = vmatprep.subr.mxu0 %v865
        %1600 = vmatpush1.msra.mxu0 %v864
        %1601 = vmatprep.subr.mxu0 %v869
        %1602 = vmatpush1.msra.mxu0 %v868
        %1603 = vmatprep.subr.mxu0 %v873
        %1604 = vmatpush1.msra.mxu0 %v872
        %1605 = vmatprep.subr.mxu0 %v877
        %1606 = vmatpush1.msra.mxu0 %v876
        %1607 = vmatprep.subr.mxu0 %v881
        %1608 = vmatpush1.msra.mxu0 %v880
        %1609 = vmatprep.subr.mxu0 %v885
        %1610 = vmatpush1.msra.mxu0 %v884
        %1611 = vmatprep.subr.mxu0 %v889
        %1612 = vmatpush1.msra.mxu0 %v888
        %1613 = vmatprep.subr.mxu0 %v893
        %1614 = vmatpush1.msra.mxu0 %v892
        %1615 = vmatprep.subr.mxu0 %v897
        %1616 = vmatpush1.msra.mxu0 %v896
        %1617 = vmatprep.subr.mxu0 %v901
        %1618 = vmatpush1.msra.mxu0 %v900
        %1619 = vmatprep.subr.mxu0 %v905
        %1620 = vmatpush1.msra.mxu0 %v904
        %1621 = vmatprep.subr.mxu0 %v909
        %1622 = vmatpush1.msra.mxu0 %v908
        %1623 = vmatprep.subr.mxu0 %v913
        %1624 = vmatpush1.msra.mxu0 %v912
        %1625 = vmatprep.subr.mxu0 %v917
        %1626 = vmatpush1.msra.mxu0 %v916
        %1627 = vmatprep.subr.mxu0 %v921
        %1628 = vmatpush1.msra.mxu0 %v920
        %1629 = vmatprep.subr.mxu0 %v925
        %1630 = vmatpush1.msra.mxu0 %v924
        %1631 = vmatprep.subr.mxu0 %v929
        %1632 = vmatpush1.msra.mxu0 %v928
        %1633 = vmatprep.subr.mxu0 %v933
        %1634 = vmatpush1.msra.mxu0 %v932
        %1635 = vmatprep.subr.mxu0 %v937
        %1636 = vmatpush1.msra.mxu0 %v936
        %1637 = vmatprep.subr.mxu0 %v941
        %1638 = vmatpush1.msra.mxu0 %v940
        %1639 = vmatprep.subr.mxu0 %v945
        %1640 = vmatpush1.msra.mxu0 %v944
        %1641 = vmatprep.subr.mxu0 %v949
        %1642 = vmatpush1.msra.mxu0 %v948
        %1643 = vmatprep.subr.mxu0 %v953
        %1644 = vmatpush1.msra.mxu0 %v952
        %1645 = vmatprep.subr.mxu0 %v957
        %1646 = vmatpush1.msra.mxu0 %v956
        %1647 = vmatprep.subr.mxu0 %v961
        %1648 = vmatpush1.msra.mxu0 %v960
        %1649 = vmatprep.subr.mxu0 %v965
        %1650 = vmatpush1.msra.mxu0 %v964
        %1651 = vmatprep.subr.mxu0 %v969
        %1652 = vmatpush1.msra.mxu0 %v968
        %1653 = vmatprep.subr.mxu0 %v973
        %1654 = vmatpush1.msra.mxu0 %v972
        %1655 = vmatprep.subr.mxu0 %v977
        %1656 = vmatpush1.msra.mxu0 %v976
        %1657 = vmatprep.mubr.f32.mxu0 %v461
        %1658 = vmatmul.mubr.f32.gmra.mrb[0].mxu0 %v460
        %v1659 = vpop.f32.mrb[0].mxu0
        %v1660 = vadd.f32 %v1589, %v1659
        %v1661 = vpop.f32.mrb[0].mxu0
        %v1662 = vadd.f32 %v1591, %v1661
        %1663 = vdwg.mxu0
        %1664 = vmatprep.subr.mxu0 %v981
        %1665 = vmatpush1.msra.mxu0 %v980
        %1666 = vmatprep.subr.mxu0 %v985
        %1667 = vmatpush1.msra.mxu0 %v984
        %1668 = vmatprep.subr.mxu0 %v989
        %1669 = vmatpush1.msra.mxu0 %v988
        %1670 = vmatprep.subr.mxu0 %v993
        %1671 = vmatpush1.msra.mxu0 %v992
        %1672 = vmatprep.subr.mxu0 %v997
        %1673 = vmatpush1.msra.mxu0 %v996
        %1674 = vmatprep.subr.mxu0 %v1001
        %1675 = vmatpush1.msra.mxu0 %v1000
        %1676 = vmatprep.subr.mxu0 %v1005
        %1677 = vmatpush1.msra.mxu0 %v1004
        %1678 = vmatprep.subr.mxu0 %v1009
        %1679 = vmatpush1.msra.mxu0 %v1008
        %1680 = vmatprep.subr.mxu0 %v1013
        %1681 = vmatpush1.msra.mxu0 %v1012
        %1682 = vmatprep.subr.mxu0 %v1017
        %1683 = vmatpush1.msra.mxu0 %v1016
        %1684 = vmatprep.subr.mxu0 %v1021
        %1685 = vmatpush1.msra.mxu0 %v1020
        %1686 = vmatprep.subr.mxu0 %v1025
        %1687 = vmatpush1.msra.mxu0 %v1024
        %1688 = vmatprep.subr.mxu0 %v1029
        %1689 = vmatpush1.msra.mxu0 %v1028
        %1690 = vmatprep.subr.mxu0 %v1033
        %1691 = vmatpush1.msra.mxu0 %v1032
        %1692 = vmatprep.subr.mxu0 %v1037
        %1693 = vmatpush1.msra.mxu0 %v1036
        %1694 = vmatprep.subr.mxu0 %v1041
        %1695 = vmatpush1.msra.mxu0 %v1040
        %1696 = vmatprep.subr.mxu0 %v1045
        %1697 = vmatpush1.msra.mxu0 %v1044
        %1698 = vmatprep.subr.mxu0 %v1049
        %1699 = vmatpush1.msra.mxu0 %v1048
        %1700 = vmatprep.subr.mxu0 %v1053
        %1701 = vmatpush1.msra.mxu0 %v1052
        %1702 = vmatprep.subr.mxu0 %v1057
        %1703 = vmatpush1.msra.mxu0 %v1056
        %1704 = vmatprep.subr.mxu0 %v1061
        %1705 = vmatpush1.msra.mxu0 %v1060
        %1706 = vmatprep.subr.mxu0 %v1065
        %1707 = vmatpush1.msra.mxu0 %v1064
        %1708 = vmatprep.subr.mxu0 %v1069
        %1709 = vmatpush1.msra.mxu0 %v1068
        %1710 = vmatprep.subr.mxu0 %v1073
        %1711 = vmatpush1.msra.mxu0 %v1072
        %1712 = vmatprep.subr.mxu0 %v1077
        %1713 = vmatpush1.msra.mxu0 %v1076
        %1714 = vmatprep.subr.mxu0 %v1081
        %1715 = vmatpush1.msra.mxu0 %v1080
        %1716 = vmatprep.subr.mxu0 %v1085
        %1717 = vmatpush1.msra.mxu0 %v1084
        %1718 = vmatprep.subr.mxu0 %v1089
        %1719 = vmatpush1.msra.mxu0 %v1088
        %1720 = vmatprep.subr.mxu0 %v1093
        %1721 = vmatpush1.msra.mxu0 %v1092
        %1722 = vmatprep.subr.mxu0 %v1097
        %1723 = vmatpush1.msra.mxu0 %v1096
        %1724 = vmatprep.subr.mxu0 %v1101
        %1725 = vmatpush1.msra.mxu0 %v1100
        %1726 = vmatprep.subr.mxu0 %v1105
        %1727 = vmatpush1.msra.mxu0 %v1104
        %1728 = vmatprep.mubr.f32.mxu0 %v463
        %1729 = vmatmul.mubr.f32.gmra.mrb[0].mxu0 %v462
        %v1730 = vpop.f32.mrb[0].mxu0
        %v1731 = vadd.f32 %v1660, %v1730
        %v1732 = vpop.f32.mrb[0].mxu0
        %v1733 = vadd.f32 %v1662, %v1732
        %1734 = vdwg.mxu0
        %1735 = vmatprep.subr.mxu0 %v1109
        %1736 = vmatpush1.msra.mxu0 %v1108
        %1737 = vmatprep.subr.mxu0 %v1113
        %1738 = vmatpush1.msra.mxu0 %v1112
        %1739 = vmatprep.subr.mxu0 %v1117
        %1740 = vmatpush1.msra.mxu0 %v1116
        %1741 = vmatprep.subr.mxu0 %v1121
        %1742 = vmatpush1.msra.mxu0 %v1120
        %1743 = vmatprep.subr.mxu0 %v1125
        %1744 = vmatpush1.msra.mxu0 %v1124
        %1745 = vmatprep.subr.mxu0 %v1129
        %1746 = vmatpush1.msra.mxu0 %v1128
        %1747 = vmatprep.subr.mxu0 %v1133
        %1748 = vmatpush1.msra.mxu0 %v1132
        %1749 = vmatprep.subr.mxu0 %v1137
        %1750 = vmatpush1.msra.mxu0 %v1136
        %1751 = vmatprep.subr.mxu0 %v1141
        %1752 = vmatpush1.msra.mxu0 %v1140
        %1753 = vmatprep.subr.mxu0 %v1145
        %1754 = vmatpush1.msra.mxu0 %v1144
        %1755 = vmatprep.subr.mxu0 %v1149
        %1756 = vmatpush1.msra.mxu0 %v1148
        %1757 = vmatprep.subr.mxu0 %v1153
        %1758 = vmatpush1.msra.mxu0 %v1152
        %1759 = vmatprep.subr.mxu0 %v1157
        %1760 = vmatpush1.msra.mxu0 %v1156
        %1761 = vmatprep.subr.mxu0 %v1161
        %1762 = vmatpush1.msra.mxu0 %v1160
        %1763 = vmatprep.subr.mxu0 %v1165
        %1764 = vmatpush1.msra.mxu0 %v1164
        %1765 = vmatprep.subr.mxu0 %v1169
        %1766 = vmatpush1.msra.mxu0 %v1168
        %1767 = vmatprep.subr.mxu0 %v1173
        %1768 = vmatpush1.msra.mxu0 %v1172
        %1769 = vmatprep.subr.mxu0 %v1177
        %1770 = vmatpush1.msra.mxu0 %v1176
        %1771 = vmatprep.subr.mxu0 %v1181
        %1772 = vmatpush1.msra.mxu0 %v1180
        %1773 = vmatprep.subr.mxu0 %v1185
        %1774 = vmatpush1.msra.mxu0 %v1184
        %1775 = vmatprep.subr.mxu0 %v1189
        %1776 = vmatpush1.msra.mxu0 %v1188
        %1777 = vmatprep.subr.mxu0 %v1193
        %1778 = vmatpush1.msra.mxu0 %v1192
        %1779 = vmatprep.subr.mxu0 %v1197
        %1780 = vmatpush1.msra.mxu0 %v1196
        %1781 = vmatprep.subr.mxu0 %v1201
        %1782 = vmatpush1.msra.mxu0 %v1200
        %1783 = vmatprep.subr.mxu0 %v1205
        %1784 = vmatpush1.msra.mxu0 %v1204
        %1785 = vmatprep.subr.mxu0 %v1209
        %1786 = vmatpush1.msra.mxu0 %v1208
        %1787 = vmatprep.subr.mxu0 %v1213
        %1788 = vmatpush1.msra.mxu0 %v1212
        %1789 = vmatprep.subr.mxu0 %v1217
        %1790 = vmatpush1.msra.mxu0 %v1216
        %1791 = vmatprep.subr.mxu0 %v1221
        %1792 = vmatpush1.msra.mxu0 %v1220
        %1793 = vmatprep.subr.mxu0 %v1225
        %1794 = vmatpush1.msra.mxu0 %v1224
        %1795 = vmatprep.subr.mxu0 %v1229
        %1796 = vmatpush1.msra.mxu0 %v1228
        %1797 = vmatprep.subr.mxu0 %v1233
        %1798 = vmatpush1.msra.mxu0 %v1232
        %1799 = vmatprep.mubr.f32.mxu0 %v465
        %1800 = vmatmul.mubr.f32.gmra.mrb[0].mxu0 %v464
        %v1801 = vpop.f32.mrb[0].mxu0
        %v1802 = vadd.f32 %v1731, %v1801
        %v1803 = vpop.f32.mrb[0].mxu0
        %v1804 = vadd.f32 %v1733, %v1803
        %1805 = vdwg.mxu0
        %v1806 = vadd.f32 %v1234, %v1518
        %v1807 = vadd.f32 %v1235, %v1520
        %v1808 = vadd.f32 %v1236, %v1802
        %v1809 = vadd.f32 %v1237, %v1804
        %1810 = vst [vmem:[#allocation2] sm:$0xff] %v1806
        %1811 = vst [vmem:[#allocation2 + $0x8] sm:$0xff] %v1807
        %1812 = vst [vmem:[#allocation2 + $0x10] sm:$0xff] %v1808
        %1813 = vst [vmem:[#allocation2 + $0x18] sm:$0xff] %v1809
        %p1814 = scmp.eq.s32.totalorder %s30, 1
        // Predicated region
        $region57: #{tpu_custom_call.1} parent=35 // pred_check
          %p1815 = pneg %p1814
        $region58: #{tpu_custom_call.1} parent=35 // pred_check_branch
          %1817 = sbr.rel (%p1815) target = $region60
        $region59: #{tpu_custom_call.1} parent=35 // pred_region
          %v1818 = vld [vmem:[#allocation2] sm:$0xff]
          %v1819 = vld [vmem:[#allocation2 + $0x8] sm:$0xff]
          %v1820 = vld [vmem:[#allocation2 + $0x10] sm:$0xff]
          %v1821 = vld [vmem:[#allocation2 + $0x18] sm:$0xff]
          %v1822 = vld [vmem:[%s278] sm:$0xf]
          %v1824 = vlaneseq
          %v1825 = vshrl.u32 %v1824, 7
          %v1826 = vsub.s32 0, %v1825
          %v1827 = vrot.slane %v1822, %v1826
          %v1828 = vlaneseq
          %v1829 = vshrl.u32 %v1828, 7
          %v1830 = vsub.s32 1, %v1829
          %v1831 = vrot.slane %v1822, %v1830
          %v1832 = vlaneseq
          %v1833 = vshrl.u32 %v1832, 7
          %v1834 = vsub.s32 2, %v1833
          %v1835 = vrot.slane %v1822, %v1834
          %v1836 = vlaneseq
          %v1837 = vshrl.u32 %v1836, 7
          %v1838 = vsub.s32 3, %v1837
          %v1839 = vrot.slane %v1822, %v1838
          %v1844 = vadd.f32 %v1818, %v1827
          %v1845 = vadd.f32 %v1819, %v1831
          %v1846 = vadd.f32 %v1820, %v1835
          %v1847 = vadd.f32 %v1821, %v1839
          %v1848 = vmax.f32 %v1844, 0.0
          %v1849 = vmax.f32 %v1845, 0.0
          %v1850 = vmax.f32 %v1846, 0.0
          %v1851 = vmax.f32 %v1847, 0.0
          %v1852 = vld [vmem:[%s287] sm:$0xff]
          %v1853 = vld [vmem:[%s287 + $0x8] sm:$0xff]
          %v1854 = vld [vmem:[%s287 + $0x10] sm:$0xff]
          %v1855 = vld [vmem:[%s287 + $0x18] sm:$0xff]
          %v1856 = vld [vmem:[%s287 + $0x20] sm:$0xff]
          %v1857 = vld [vmem:[%s287 + $0x28] sm:$0xff]
          %v1858 = vld [vmem:[%s287 + $0x30] sm:$0xff]
          %v1859 = vld [vmem:[%s287 + $0x38] sm:$0xff]
          %v1860 = vld [vmem:[%s287 + $0x40] sm:$0xff]
          %v1861 = vld [vmem:[%s287 + $0x48] sm:$0xff]
          %v1862 = vld [vmem:[%s287 + $0x50] sm:$0xff]
          %v1863 = vld [vmem:[%s287 + $0x58] sm:$0xff]
          %v1864 = vld [vmem:[%s287 + $0x60] sm:$0xff]
          %v1865 = vld [vmem:[%s287 + $0x68] sm:$0xff]
          %v1866 = vld [vmem:[%s287 + $0x70] sm:$0xff]
          %v1867 = vld [vmem:[%s287 + $0x78] sm:$0xff]
          %v1868 = vld [vmem:[%s287 + $0x80] sm:$0xff]
          %v1869 = vld [vmem:[%s287 + $0x88] sm:$0xff]
          %v1870 = vld [vmem:[%s287 + $0x90] sm:$0xff]
          %v1871 = vld [vmem:[%s287 + $0x98] sm:$0xff]
          %v1872 = vld [vmem:[%s287 + $0xa0] sm:$0xff]
          %v1873 = vld [vmem:[%s287 + $0xa8] sm:$0xff]
          %v1874 = vld [vmem:[%s287 + $0xb0] sm:$0xff]
          %v1875 = vld [vmem:[%s287 + $0xb8] sm:$0xff]
          %v1876 = vld [vmem:[%s287 + $0xc0] sm:$0xff]
          %v1877 = vld [vmem:[%s287 + $0xc8] sm:$0xff]
          %v1878 = vld [vmem:[%s287 + $0xd0] sm:$0xff]
          %v1879 = vld [vmem:[%s287 + $0xd8] sm:$0xff]
          %v1880 = vld [vmem:[%s287 + $0xe0] sm:$0xff]
          %v1881 = vld [vmem:[%s287 + $0xe8] sm:$0xff]
          %v1882 = vld [vmem:[%s287 + $0xf0] sm:$0xff]
          %v1883 = vld [vmem:[%s287 + $0xf8] sm:$0xff]
          %v1884 = vld [vmem:[%s287 + $0x100] sm:$0xff]
          %v1885 = vld [vmem:[%s287 + $0x108] sm:$0xff]
          %v1886 = vld [vmem:[%s287 + $0x110] sm:$0xff]
          %v1887 = vld [vmem:[%s287 + $0x118] sm:$0xff]
          %v1888 = vld [vmem:[%s287 + $0x120] sm:$0xff]
          %v1889 = vld [vmem:[%s287 + $0x128] sm:$0xff]
          %v1890 = vld [vmem:[%s287 + $0x130] sm:$0xff]
          %v1891 = vld [vmem:[%s287 + $0x138] sm:$0xff]
          %v1892 = vld [vmem:[%s287 + $0x140] sm:$0xff]
          %v1893 = vld [vmem:[%s287 + $0x148] sm:$0xff]
          %v1894 = vld [vmem:[%s287 + $0x150] sm:$0xff]
          %v1895 = vld [vmem:[%s287 + $0x158] sm:$0xff]
          %v1896 = vld [vmem:[%s287 + $0x160] sm:$0xff]
          %v1897 = vld [vmem:[%s287 + $0x168] sm:$0xff]
          %v1898 = vld [vmem:[%s287 + $0x170] sm:$0xff]
          %v1899 = vld [vmem:[%s287 + $0x178] sm:$0xff]
          %v1900 = vld [vmem:[%s287 + $0x180] sm:$0xff]
          %v1901 = vld [vmem:[%s287 + $0x188] sm:$0xff]
          %v1902 = vld [vmem:[%s287 + $0x190] sm:$0xff]
          %v1903 = vld [vmem:[%s287 + $0x198] sm:$0xff]
          %v1904 = vld [vmem:[%s287 + $0x1a0] sm:$0xff]
          %v1905 = vld [vmem:[%s287 + $0x1a8] sm:$0xff]
          %v1906 = vld [vmem:[%s287 + $0x1b0] sm:$0xff]
          %v1907 = vld [vmem:[%s287 + $0x1b8] sm:$0xff]
          %v1908 = vld [vmem:[%s287 + $0x1c0] sm:$0xff]
          %v1909 = vld [vmem:[%s287 + $0x1c8] sm:$0xff]
          %v1910 = vld [vmem:[%s287 + $0x1d0] sm:$0xff]
          %v1911 = vld [vmem:[%s287 + $0x1d8] sm:$0xff]
          %v1912 = vld [vmem:[%s287 + $0x1e0] sm:$0xff]
          %v1913 = vld [vmem:[%s287 + $0x1e8] sm:$0xff]
          %v1914 = vld [vmem:[%s287 + $0x1f0] sm:$0xff]
          %v1915 = vld [vmem:[%s287 + $0x1f8] sm:$0xff]
          %v1916 = vunpack.c.l.bf16 %v1852
          %v1917 = vunpack.c.h.bf16 %v1852
          %v1918 = vunpack.c.l.bf16 %v1853
          %v1919 = vunpack.c.h.bf16 %v1853
          %v1920 = vunpack.c.l.bf16 %v1854
          %v1921 = vunpack.c.h.bf16 %v1854
          %v1922 = vunpack.c.l.bf16 %v1855
          %v1923 = vunpack.c.h.bf16 %v1855
          %v1924 = vunpack.c.l.bf16 %v1856
          %v1925 = vunpack.c.h.bf16 %v1856
          %v1926 = vunpack.c.l.bf16 %v1857
          %v1927 = vunpack.c.h.bf16 %v1857
          %v1928 = vunpack.c.l.bf16 %v1858
          %v1929 = vunpack.c.h.bf16 %v1858
          %v1930 = vunpack.c.l.bf16 %v1859
          %v1931 = vunpack.c.h.bf16 %v1859
          %v1932 = vunpack.c.l.bf16 %v1860
          %v1933 = vunpack.c.h.bf16 %v1860
          %v1934 = vunpack.c.l.bf16 %v1861
          %v1935 = vunpack.c.h.bf16 %v1861
          %v1936 = vunpack.c.l.bf16 %v1862
          %v1937 = vunpack.c.h.bf16 %v1862
          %v1938 = vunpack.c.l.bf16 %v1863
          %v1939 = vunpack.c.h.bf16 %v1863
          %v1940 = vunpack.c.l.bf16 %v1864
          %v1941 = vunpack.c.h.bf16 %v1864
          %v1942 = vunpack.c.l.bf16 %v1865
          %v1943 = vunpack.c.h.bf16 %v1865
          %v1944 = vunpack.c.l.bf16 %v1866
          %v1945 = vunpack.c.h.bf16 %v1866
          %v1946 = vunpack.c.l.bf16 %v1867
          %v1947 = vunpack.c.h.bf16 %v1867
          %v1948 = vunpack.c.l.bf16 %v1868
          %v1949 = vunpack.c.h.bf16 %v1868
          %v1950 = vunpack.c.l.bf16 %v1869
          %v1951 = vunpack.c.h.bf16 %v1869
          %v1952 = vunpack.c.l.bf16 %v1870
          %v1953 = vunpack.c.h.bf16 %v1870
          %v1954 = vunpack.c.l.bf16 %v1871
          %v1955 = vunpack.c.h.bf16 %v1871
          %v1956 = vunpack.c.l.bf16 %v1872
          %v1957 = vunpack.c.h.bf16 %v1872
          %v1958 = vunpack.c.l.bf16 %v1873
          %v1959 = vunpack.c.h.bf16 %v1873
          %v1960 = vunpack.c.l.bf16 %v1874
          %v1961 = vunpack.c.h.bf16 %v1874
          %v1962 = vunpack.c.l.bf16 %v1875
          %v1963 = vunpack.c.h.bf16 %v1875
          %v1964 = vunpack.c.l.bf16 %v1876
          %v1965 = vunpack.c.h.bf16 %v1876
          %v1966 = vunpack.c.l.bf16 %v1877
          %v1967 = vunpack.c.h.bf16 %v1877
          %v1968 = vunpack.c.l.bf16 %v1878
          %v1969 = vunpack.c.h.bf16 %v1878
          %v1970 = vunpack.c.l.bf16 %v1879
          %v1971 = vunpack.c.h.bf16 %v1879
          %v1972 = vunpack.c.l.bf16 %v1880
          %v1973 = vunpack.c.h.bf16 %v1880
          %v1974 = vunpack.c.l.bf16 %v1881
          %v1975 = vunpack.c.h.bf16 %v1881
          %v1976 = vunpack.c.l.bf16 %v1882
          %v1977 = vunpack.c.h.bf16 %v1882
          %v1978 = vunpack.c.l.bf16 %v1883
          %v1979 = vunpack.c.h.bf16 %v1883
          %v1980 = vunpack.c.l.bf16 %v1884
          %v1981 = vunpack.c.h.bf16 %v1884
          %v1982 = vunpack.c.l.bf16 %v1885
          %v1983 = vunpack.c.h.bf16 %v1885
          %v1984 = vunpack.c.l.bf16 %v1886
          %v1985 = vunpack.c.h.bf16 %v1886
          %v1986 = vunpack.c.l.bf16 %v1887
          %v1987 = vunpack.c.h.bf16 %v1887
          %v1988 = vunpack.c.l.bf16 %v1888
          %v1989 = vunpack.c.h.bf16 %v1888
          %v1990 = vunpack.c.l.bf16 %v1889
          %v1991 = vunpack.c.h.bf16 %v1889
          %v1992 = vunpack.c.l.bf16 %v1890
          %v1993 = vunpack.c.h.bf16 %v1890
          %v1994 = vunpack.c.l.bf16 %v1891
          %v1995 = vunpack.c.h.bf16 %v1891
          %v1996 = vunpack.c.l.bf16 %v1892
          %v1997 = vunpack.c.h.bf16 %v1892
          %v1998 = vunpack.c.l.bf16 %v1893
          %v1999 = vunpack.c.h.bf16 %v1893
          %v2000 = vunpack.c.l.bf16 %v1894
          %v2001 = vunpack.c.h.bf16 %v1894
          %v2002 = vunpack.c.l.bf16 %v1895
          %v2003 = vunpack.c.h.bf16 %v1895
          %v2004 = vunpack.c.l.bf16 %v1896
          %v2005 = vunpack.c.h.bf16 %v1896
          %v2006 = vunpack.c.l.bf16 %v1897
          %v2007 = vunpack.c.h.bf16 %v1897
          %v2008 = vunpack.c.l.bf16 %v1898
          %v2009 = vunpack.c.h.bf16 %v1898
          %v2010 = vunpack.c.l.bf16 %v1899
          %v2011 = vunpack.c.h.bf16 %v1899
          %v2012 = vunpack.c.l.bf16 %v1900
          %v2013 = vunpack.c.h.bf16 %v1900
          %v2014 = vunpack.c.l.bf16 %v1901
          %v2015 = vunpack.c.h.bf16 %v1901
          %v2016 = vunpack.c.l.bf16 %v1902
          %v2017 = vunpack.c.h.bf16 %v1902
          %v2018 = vunpack.c.l.bf16 %v1903
          %v2019 = vunpack.c.h.bf16 %v1903
          %v2020 = vunpack.c.l.bf16 %v1904
          %v2021 = vunpack.c.h.bf16 %v1904
          %v2022 = vunpack.c.l.bf16 %v1905
          %v2023 = vunpack.c.h.bf16 %v1905
          %v2024 = vunpack.c.l.bf16 %v1906
          %v2025 = vunpack.c.h.bf16 %v1906
          %v2026 = vunpack.c.l.bf16 %v1907
          %v2027 = vunpack.c.h.bf16 %v1907
          %v2028 = vunpack.c.l.bf16 %v1908
          %v2029 = vunpack.c.h.bf16 %v1908
          %v2030 = vunpack.c.l.bf16 %v1909
          %v2031 = vunpack.c.h.bf16 %v1909
          %v2032 = vunpack.c.l.bf16 %v1910
          %v2033 = vunpack.c.h.bf16 %v1910
          %v2034 = vunpack.c.l.bf16 %v1911
          %v2035 = vunpack.c.h.bf16 %v1911
          %v2036 = vunpack.c.l.bf16 %v1912
          %v2037 = vunpack.c.h.bf16 %v1912
          %v2038 = vunpack.c.l.bf16 %v1913
          %v2039 = vunpack.c.h.bf16 %v1913
          %v2040 = vunpack.c.l.bf16 %v1914
          %v2041 = vunpack.c.h.bf16 %v1914
          %v2042 = vunpack.c.l.bf16 %v1915
          %v2043 = vunpack.c.h.bf16 %v1915
          %2044 = vmatprep.subr.mxu0 %v1917
          %2045 = vmatpush1.msra.mxu0 %v1916
          %2046 = vmatprep.subr.mxu0 %v1919
          %2047 = vmatpush1.msra.mxu0 %v1918
          %2048 = vmatprep.subr.mxu0 %v1921
          %2049 = vmatpush1.msra.mxu0 %v1920
          %2050 = vmatprep.subr.mxu0 %v1923
          %2051 = vmatpush1.msra.mxu0 %v1922
          %2052 = vmatprep.subr.mxu0 %v1925
          %2053 = vmatpush1.msra.mxu0 %v1924
          %2054 = vmatprep.subr.mxu0 %v1927
          %2055 = vmatpush1.msra.mxu0 %v1926
          %2056 = vmatprep.subr.mxu0 %v1929
          %2057 = vmatpush1.msra.mxu0 %v1928
          %2058 = vmatprep.subr.mxu0 %v1931
          %2059 = vmatpush1.msra.mxu0 %v1930
          %2060 = vmatprep.subr.mxu0 %v1933
          %2061 = vmatpush1.msra.mxu0 %v1932
          %2062 = vmatprep.subr.mxu0 %v1935
          %2063 = vmatpush1.msra.mxu0 %v1934
          %2064 = vmatprep.subr.mxu0 %v1937
          %2065 = vmatpush1.msra.mxu0 %v1936
          %2066 = vmatprep.subr.mxu0 %v1939
          %2067 = vmatpush1.msra.mxu0 %v1938
          %2068 = vmatprep.subr.mxu0 %v1941
          %2069 = vmatpush1.msra.mxu0 %v1940
          %2070 = vmatprep.subr.mxu0 %v1943
          %2071 = vmatpush1.msra.mxu0 %v1942
          %2072 = vmatprep.subr.mxu0 %v1945
          %2073 = vmatpush1.msra.mxu0 %v1944
          %2074 = vmatprep.subr.mxu0 %v1947
          %2075 = vmatpush1.msra.mxu0 %v1946
          %2076 = vmatprep.subr.mxu0 %v1949
          %2077 = vmatpush1.msra.mxu0 %v1948
          %2078 = vmatprep.subr.mxu0 %v1951
          %2079 = vmatpush1.msra.mxu0 %v1950
          %2080 = vmatprep.subr.mxu0 %v1953
          %2081 = vmatpush1.msra.mxu0 %v1952
          %2082 = vmatprep.subr.mxu0 %v1955
          %2083 = vmatpush1.msra.mxu0 %v1954
          %2084 = vmatprep.subr.mxu0 %v1957
          %2085 = vmatpush1.msra.mxu0 %v1956
          %2086 = vmatprep.subr.mxu0 %v1959
          %2087 = vmatpush1.msra.mxu0 %v1958
          %2088 = vmatprep.subr.mxu0 %v1961
          %2089 = vmatpush1.msra.mxu0 %v1960
          %2090 = vmatprep.subr.mxu0 %v1963
          %2091 = vmatpush1.msra.mxu0 %v1962
          %2092 = vmatprep.subr.mxu0 %v1965
          %2093 = vmatpush1.msra.mxu0 %v1964
          %2094 = vmatprep.subr.mxu0 %v1967
          %2095 = vmatpush1.msra.mxu0 %v1966
          %2096 = vmatprep.subr.mxu0 %v1969
          %2097 = vmatpush1.msra.mxu0 %v1968
          %2098 = vmatprep.subr.mxu0 %v1971
          %2099 = vmatpush1.msra.mxu0 %v1970
          %2100 = vmatprep.subr.mxu0 %v1973
          %2101 = vmatpush1.msra.mxu0 %v1972
          %2102 = vmatprep.subr.mxu0 %v1975
          %2103 = vmatpush1.msra.mxu0 %v1974
          %2104 = vmatprep.subr.mxu0 %v1977
          %2105 = vmatpush1.msra.mxu0 %v1976
          %2106 = vmatprep.subr.mxu0 %v1979
          %2107 = vmatpush1.msra.mxu0 %v1978
          %2108 = vmatprep.mubr.f32.mxu0 %v1849
          %2109 = vmatmul.mubr.f32.gmra.mrb[0].mxu0 %v1848
          %v2110 = vpop.f32.mrb[0].mxu0
          %v2111 = vadd.f32 0.0, %v2110
          %v2112 = vpop.f32.mrb[0].mxu0
          %v2113 = vadd.f32 0.0, %v2112
          %2114 = vdwg.mxu0
          %2115 = vmatprep.subr.mxu0 %v1981
          %2116 = vmatpush1.msra.mxu0 %v1980
          %2117 = vmatprep.subr.mxu0 %v1983
          %2118 = vmatpush1.msra.mxu0 %v1982
          %2119 = vmatprep.subr.mxu0 %v1985
          %2120 = vmatpush1.msra.mxu0 %v1984
          %2121 = vmatprep.subr.mxu0 %v1987
          %2122 = vmatpush1.msra.mxu0 %v1986
          %2123 = vmatprep.subr.mxu0 %v1989
          %2124 = vmatpush1.msra.mxu0 %v1988
          %2125 = vmatprep.subr.mxu0 %v1991
          %2126 = vmatpush1.msra.mxu0 %v1990
          %2127 = vmatprep.subr.mxu0 %v1993
          %2128 = vmatpush1.msra.mxu0 %v1992
          %2129 = vmatprep.subr.mxu0 %v1995
          %2130 = vmatpush1.msra.mxu0 %v1994
          %2131 = vmatprep.subr.mxu0 %v1997
          %2132 = vmatpush1.msra.mxu0 %v1996
          %2133 = vmatprep.subr.mxu0 %v1999
          %2134 = vmatpush1.msra.mxu0 %v1998
          %2135 = vmatprep.subr.mxu0 %v2001
          %2136 = vmatpush1.msra.mxu0 %v2000
          %2137 = vmatprep.subr.mxu0 %v2003
          %2138 = vmatpush1.msra.mxu0 %v2002
          %2139 = vmatprep.subr.mxu0 %v2005
          %2140 = vmatpush1.msra.mxu0 %v2004
          %2141 = vmatprep.subr.mxu0 %v2007
          %2142 = vmatpush1.msra.mxu0 %v2006
          %2143 = vmatprep.subr.mxu0 %v2009
          %2144 = vmatpush1.msra.mxu0 %v2008
          %2145 = vmatprep.subr.mxu0 %v2011
          %2146 = vmatpush1.msra.mxu0 %v2010
          %2147 = vmatprep.subr.mxu0 %v2013
          %2148 = vmatpush1.msra.mxu0 %v2012
          %2149 = vmatprep.subr.mxu0 %v2015
          %2150 = vmatpush1.msra.mxu0 %v2014
          %2151 = vmatprep.subr.mxu0 %v2017
          %2152 = vmatpush1.msra.mxu0 %v2016
          %2153 = vmatprep.subr.mxu0 %v2019
          %2154 = vmatpush1.msra.mxu0 %v2018
          %2155 = vmatprep.subr.mxu0 %v2021
          %2156 = vmatpush1.msra.mxu0 %v2020
          %2157 = vmatprep.subr.mxu0 %v2023
          %2158 = vmatpush1.msra.mxu0 %v2022
          %2159 = vmatprep.subr.mxu0 %v2025
          %2160 = vmatpush1.msra.mxu0 %v2024
          %2161 = vmatprep.subr.mxu0 %v2027
          %2162 = vmatpush1.msra.mxu0 %v2026
          %2163 = vmatprep.subr.mxu0 %v2029
          %2164 = vmatpush1.msra.mxu0 %v2028
          %2165 = vmatprep.subr.mxu0 %v2031
          %2166 = vmatpush1.msra.mxu0 %v2030
          %2167 = vmatprep.subr.mxu0 %v2033
          %2168 = vmatpush1.msra.mxu0 %v2032
          %2169 = vmatprep.subr.mxu0 %v2035
          %2170 = vmatpush1.msra.mxu0 %v2034
          %2171 = vmatprep.subr.mxu0 %v2037
          %2172 = vmatpush1.msra.mxu0 %v2036
          %2173 = vmatprep.subr.mxu0 %v2039
          %2174 = vmatpush1.msra.mxu0 %v2038
          %2175 = vmatprep.subr.mxu0 %v2041
          %2176 = vmatpush1.msra.mxu0 %v2040
          %2177 = vmatprep.subr.mxu0 %v2043
          %2178 = vmatpush1.msra.mxu0 %v2042
          %2179 = vmatprep.mubr.f32.mxu0 %v1851
          %2180 = vmatmul.mubr.f32.gmra.mrb[0].mxu0 %v1850
          %v2181 = vpop.f32.mrb[0].mxu0
          %v2182 = vadd.f32 %v2111, %v2181
          %v2183 = vpop.f32.mrb[0].mxu0
          %v2184 = vadd.f32 %v2113, %v2183
          %2185 = vdwg.mxu0
          %2186 = vst [vmem:[%s321] sm:$0xff] %v2182
          %2187 = vst [vmem:[%s321 + $0x8] sm:$0xff] %v2184
        $region60: #{tpu_custom_call.1} parent=35 // pred_fallthru
          _
        %s2188 = sand.u32 %s146, 1
        %s2189 = scalar_lea.sflag [#allocation7], %s2188
        %s2190 = sand.u32 %s146, 1
        %s2191 = smul.addr %s2190, 16
        %s2192 = scalar_lea.vmem [#allocation13], %s2191
        // Predicated region
        $region61: #{tpu_custom_call.1} parent=35 // pred_check
          %p2193 = pneg %p156
        $region62: #{tpu_custom_call.1} parent=35 // pred_check_branch
          %2195 = sbr.rel (%p2193) target = $region64
        $region63: #{tpu_custom_call.1} parent=35 // pred_region
          %s2197 = ssub.s32 256, 256
          %2198 = vsyncadd %s2189, %s2197
          %s2199 = smul.addr %s29, 2
          %s2200 = smul.addr %s2199, 128
          %s2201 = scalar_lea.hbm %s4, %s2200
          %s2203 = sshll.u32 %s2192, 4
          %s2204 = int_to_ptr.vmem [resolvable:$true] %s2203
          %2206 = dma.vmem_to_hbm [thread:$0]  %s2204, 256, %s2201, %s2189
        $region64: #{tpu_custom_call.1} parent=35 // pred_fallthru
          _
      $region36: #{tpu_custom_call.1} parent=5 // pred_fallthru
        _
      %p2207 = scmp.le.s32.totalorder 2, %s20
      // Predicated region
      $region65: #{tpu_custom_call.1} parent=5 // pred_check
        %p2208 = pneg %p2207
      $region66: #{tpu_custom_call.1} parent=5 // pred_check_branch
        %2210 = sbr.rel (%p2208) target = $region68
      $region67: #{tpu_custom_call.1} parent=5 // pred_region
        %s2211 = ssub.s32 %s20, 2
        // Predicated region
        $region69: #{tpu_custom_call.1} parent=67 // pred_check
          %p2212 = pneg %p162
        $region70: #{tpu_custom_call.1} parent=67 // pred_check_branch
          %2214 = sbr.rel (%p2212) target = $region72
        $region71: #{tpu_custom_call.1} parent=67 // pred_region
          %s2215 = sand.u32 %s147, 1
          %s2216 = scalar_lea.sflag [#allocation7], %s2215
          %s2217 = sand.u32 %s147, 1
          %s2218 = smul.addr %s2217, 16
          %s2219 = scalar_lea.vmem [#allocation13], %s2218
          %2220 = dma.done %s2216, 256
        $region72: #{tpu_custom_call.1} parent=67 // pred_fallthru
          _
      $region68: #{tpu_custom_call.1} parent=5 // pred_fallthru
        _
    $region6: #{tpu_custom_call.1} parent=1 // loop_footer
      %s24 = sadd.s32 1, %s20
    $region7: #{tpu_custom_call.1} parent=1 // loop_footer_branch
      %19 = sbr.rel target = $region3
    $region8: #{tpu_custom_call.1} parent=1 // loop_exit
      _
    %2221 = vsyncpa [#allocation6], 1
    %s2222 = scalar_lea.sflag [#allocation6], 1
    %2223 = vsyncpa %s2222, 1
    %2224 = vsyncpa [#allocation9], 1
    %s2225 = scalar_lea.sflag [#allocation9], 1
    %2226 = vsyncpa %s2225, 1
    %2227 = vsyncpa [#allocation12], 1
    %s2228 = scalar_lea.sflag [#allocation12], 1
    %2229 = vsyncpa %s2228, 1
    %2230 = vsyncpa [#allocation7], 1
    %s2231 = scalar_lea.sflag [#allocation7], 1
    %2232 = vsyncpa %s2231, 1

</llo_original>
